<compile_context>
chip_gen: v5e
topology: v5e:2x2
jax: 0.10.0
libtpu: 0.0.40
codegen_flags: <defaults>
</compile_context>

<pallas_src>
import functools

import jax
import jax.numpy as jnp
from jax.experimental import pallas as pl
from jax.experimental.pallas import tpu as pltpu


def _round_up(x, m):
    return ((x + m - 1) // m) * m


# ----------------------------------------------------------------------------
# Pallas kernels
# ----------------------------------------------------------------------------
def _pointnet_kernel(x_ref, w1_ref, b1_ref, w2_ref, b2_ref, o_ref):
    # Fused per-point MLP: 3 -> hidden (ReLU) -> out_dim.
    # First layer has a contraction dim of 3, so keep it off the MXU and do it as
    # three broadcast multiply-adds on the VPU; second layer goes to the MXU.
    x = x_ref[...]                                   # (TM, 3)
    w1 = w1_ref[...]                                 # (3, H)
    h = (x[:, 0:1] * w1[0:1, :] +
         x[:, 1:2] * w1[1:2, :] +
         x[:, 2:3] * w1[2:3, :]) + b1_ref[...]
    h = jnp.maximum(h, 0.0)
    o_ref[...] = (jnp.dot(h, w2_ref[...], preferred_element_type=jnp.float32)
                  + b2_ref[...])


def _attn_stack_kernel(pt_in_ref, part_in_ref, mbias_ref,
                       wq1_ref, bq1_ref, wpart_ref, bpart_ref,
                       wpt2_ref, bpt2_ref,
                       pt_out_ref, part_out_ref,
                       pt_sc, part_sc, *, scale, d):
    # One grid step = one attention layer of one batch element.  Tokens live in VMEM
    # scratch across the layer ("arbitrary") axis; per-layer weights are streamed in as
    # lane-dense concatenated matrices.
    l = pl.program_id(1)

    @pl.when(l == 0)
    def _():
        pt_sc[...] = pt_in_ref[0]
        part_sc[...] = part_in_ref[0]

    pt = pt_sc[...]                                  # (M, D)
    part = part_sc[...]                              # (K, D)
    mbias = mbias_ref[0]                             # (1, K) additive (-1e9 on masked)

    # Lane-dense projection of the (pre-update) part tokens: [k1 | v1 | q2]  (D -> 3D)
    part_proj = (jnp.dot(part, wpart_ref[0], preferred_element_type=jnp.float32)
                 + bpart_ref[0])
    k1 = part_proj[:, 0 * d:1 * d]
    v1 = part_proj[:, 1 * d:2 * d]
    q2 = part_proj[:, 2 * d:3 * d]

    # Direction 1: point tokens attend to part tokens (masked), residual add.
    q1 = jnp.dot(pt, wq1_ref[0], preferred_element_type=jnp.float32) + bq1_ref[0]
    s1 = jax.lax.dot_general(q1, k1, (((1,), (1,)), ((), ())),
                             preferred_element_type=jnp.float32) * scale + mbias
    s1 = s1 - jnp.max(s1, axis=-1, keepdims=True)
    p1 = jnp.exp(s1)
    p1 = p1 * pl.reciprocal(jnp.sum(p1, axis=-1, keepdims=True), approx=True)
    pt_new = pt + jnp.dot(p1, v1, preferred_element_type=jnp.float32)

    # Direction 2: part tokens attend to the UPDATED point tokens (no mask).
    # Lane-dense projection of the updated point tokens: [k2 | v2]  (D -> 2D)
    pt_proj = (jnp.dot(pt_new, wpt2_ref[0], preferred_element_type=jnp.float32)
               + bpt2_ref[0])
    k2 = pt_proj[:, 0 * d:1 * d]
    v2 = pt_proj[:, 1 * d:2 * d]
    s2 = jax.lax.dot_general(q2, k2, (((1,), (1,)), ((), ())),
                             preferred_element_type=jnp.float32) * scale
    s2 = s2 - jnp.max(s2, axis=-1, keepdims=True)
    p2 = jnp.exp(s2)
    p2 = p2 * pl.reciprocal(jnp.sum(p2, axis=-1, keepdims=True), approx=True)
    part_new = part + jnp.dot(p2, v2, preferred_element_type=jnp.float32)

    pt_sc[...] = pt_new
    part_sc[...] = part_new

    @pl.when(l == pl.num_programs(1) - 1)
    def _():
        pt_out_ref[0] = pt_new
        part_out_ref[0] = part_new


def _seg_head_kernel(pt_ref, part_ref, mbias_ref,
                     wq1_ref, bq1_ref, wq2_ref, bq2_ref,
                     wk1_ref, bk1_ref, wk2_ref, bk2_ref,
                     o_ref, *, scale):
    # Fused SegmentationHead: Wq/Wk FeedForwards + masked softmax over parts.
    # torch: scores = (key @ query^T)/sqrt(d) -> mask rows where mask==1 -> transpose
    #        -> softmax over K.  Equivalent formulation below.
    pt = pt_ref[0]                                   # (M, D)
    part = part_ref[0]                               # (K, D)
    mbias = mbias_ref[0]                             # (1, K)

    q = jnp.maximum(jnp.dot(pt, wq1_ref[...], preferred_element_type=jnp.float32)
                    + bq1_ref[...], 0.0)
    q = jnp.dot(q, wq2_ref[...], preferred_element_type=jnp.float32) + bq2_ref[...]
    k = jnp.maximum(jnp.dot(part, wk1_ref[...], preferred_element_type=jnp.float32)
                    + bk1_ref[...], 0.0)
    k = jnp.dot(k, wk2_ref[...], preferred_element_type=jnp.float32) + bk2_ref[...]

    s = jax.lax.dot_general(q, k, (((1,), (1,)), ((), ())),
                            preferred_element_type=jnp.float32) * scale + mbias
    s = s - jnp.max(s, axis=-1, keepdims=True)
    p = jnp.exp(s)
    o_ref[0] = p / jnp.sum(p, axis=-1, keepdims=True)   # exact normalization for output


# ----------------------------------------------------------------------------
# pallas_call wrappers (all called inside one top-level jit)
# ----------------------------------------------------------------------------
def pointnet_apply(params, pts):
    # pts: (..., N, 3) -> per-point features (..., N, out_dim)
    # TODO(synk): original PointNet source unavailable; per-point 3->64->out_dim MLP used.
    lead = pts.shape[:-1]
    x = pts.reshape(-1, 3)
    rows = x.shape[0]
    w1, b1 = params["l1"]
    w2, b2 = params["l2"]
    hid = w1.shape[1]
    out_dim = w2.shape[1]

    tm = min(512, _round_up(rows, 8))
    rows_pad = _round_up(rows, tm)
    if rows_pad != rows:
        x = jnp.pad(x, ((0, rows_pad - rows), (0, 0)))

    y = pl.pallas_call(
        _pointnet_kernel,
        out_shape=jax.ShapeDtypeStruct((rows_pad, out_dim), jnp.float32),
        grid=(rows_pad // tm,),
        in_specs=[
            pl.BlockSpec((tm, 3), lambda i: (i, 0)),
            pl.BlockSpec((3, hid), lambda i: (0, 0)),      # weights stay resident
            pl.BlockSpec((1, hid), lambda i: (0, 0)),
            pl.BlockSpec((hid, out_dim), lambda i: (0, 0)),
            pl.BlockSpec((1, out_dim), lambda i: (0, 0)),
        ],
        out_specs=pl.BlockSpec((tm, out_dim), lambda i: (i, 0)),
        compiler_params=pltpu.CompilerParams(dimension_semantics=("parallel",)),
    )(x, w1, b1.reshape(1, hid), w2, b2.reshape(1, out_dim))
    return y[:rows].reshape(lead + (out_dim,))


def attention_stack_apply(stack, point_tokens, part_tokens, mask_bias):
    # point_tokens: (B, M, D), part_tokens: (B, K, D), mask_bias: (B, 1, K)
    B, M, D = point_tokens.shape
    K = part_tokens.shape[1]
    L = stack["w_q1"].shape[0]
    scale = 1.0 / float(D) ** 0.5

    return pl.pallas_call(
        functools.partial(_attn_stack_kernel, scale=scale, d=D),
        out_shape=(jax.ShapeDtypeStruct((B, M, D), jnp.float32),
                   jax.ShapeDtypeStruct((B, K, D), jnp.float32)),
        grid=(B, L),
        in_specs=[
            pl.BlockSpec((1, M, D), lambda b, l: (b, 0, 0)),
            pl.BlockSpec((1, K, D), lambda b, l: (b, 0, 0)),
            pl.BlockSpec((1, 1, K), lambda b, l: (b, 0, 0)),
            pl.BlockSpec((1, D, D), lambda b, l: (l, 0, 0)),
            pl.BlockSpec((1, 1, D), lambda b, l: (l, 0, 0)),
            pl.BlockSpec((1, D, 3 * D), lambda b, l: (l, 0, 0)),
            pl.BlockSpec((1, 1, 3 * D), lambda b, l: (l, 0, 0)),
            pl.BlockSpec((1, D, 2 * D), lambda b, l: (l, 0, 0)),
            pl.BlockSpec((1, 1, 2 * D), lambda b, l: (l, 0, 0)),
        ],
        out_specs=(pl.BlockSpec((1, M, D), lambda b, l: (b, 0, 0)),
                   pl.BlockSpec((1, K, D), lambda b, l: (b, 0, 0))),
        scratch_shapes=[pltpu.VMEM((M, D), jnp.float32),
                        pltpu.VMEM((K, D), jnp.float32)],
        compiler_params=pltpu.CompilerParams(
            dimension_semantics=("parallel", "arbitrary")),
    )(point_tokens, part_tokens, mask_bias,
      stack["w_q1"], stack["b_q1"],
      stack["w_part"], stack["b_part"],
      stack["w_pt2"], stack["b_pt2"])


def segmentation_head_apply(params, point_tokens, part_tokens, mask_bias):
    B, M, D = point_tokens.shape
    K = part_tokens.shape[1]
    scale = 1.0 / float(D) ** 0.5
    wq1, bq1 = params["Wq"]["l1"]
    wq2, bq2 = params["Wq"]["l2"]
    wk1, bk1 = params["Wk"]["l1"]
    wk2, bk2 = params["Wk"]["l2"]

    return pl.pallas_call(
        functools.partial(_seg_head_kernel, scale=scale),
        out_shape=jax.ShapeDtypeStruct((B, M, K), jnp.float32),
        grid=(B,),
        in_specs=[
            pl.BlockSpec((1, M, D), lambda b: (b, 0, 0)),
            pl.BlockSpec((1, K, D), lambda b: (b, 0, 0)),
            pl.BlockSpec((1, 1, K), lambda b: (b, 0, 0)),
            pl.BlockSpec((D, D), lambda b: (0, 0)),
            pl.BlockSpec((1, D), lambda b: (0, 0)),
            pl.BlockSpec((D, D), lambda b: (0, 0)),
            pl.BlockSpec((1, D), lambda b: (0, 0)),
            pl.BlockSpec((D, D), lambda b: (0, 0)),
            pl.BlockSpec((1, D), lambda b: (0, 0)),
            pl.BlockSpec((D, D), lambda b: (0, 0)),
            pl.BlockSpec((1, D), lambda b: (0, 0)),
        ],
        out_specs=pl.BlockSpec((1, M, K), lambda b: (b, 0, 0)),
        compiler_params=pltpu.CompilerParams(dimension_semantics=("parallel",)),
    )(point_tokens, part_tokens, mask_bias,
      wq1, bq1.reshape(1, D), wq2, bq2.reshape(1, D),
      wk1, bk1.reshape(1, D), wk2, bk2.reshape(1, D))


# ----------------------------------------------------------------------------
# Parameter init (deterministic, synthetic weights)
# ----------------------------------------------------------------------------
def init_linear_params(key, cin, cout):
    kw, kb = jax.random.split(key)
    w = jax.random.normal(kw, (cin, cout), jnp.float32) * 0.05
    b = jax.random.normal(kb, (cout,), jnp.float32) * 0.01
    return (w, b)


def init_pointnet(key, out_dim, hidden=64):
    k1, k2 = jax.random.split(key)
    return dict(l1=init_linear_params(k1, 3, hidden),
                l2=init_linear_params(k2, hidden, out_dim))


def init_ff(key, h):
    # TODO(synk): original FeedForward source unavailable; standard 2-layer MLP used.
    k1, k2 = jax.random.split(key)
    return dict(l1=init_linear_params(k1, h, h),
                l2=init_linear_params(k2, h, h))


def init_attention_stack(key, h, n_layers):
    # Per-layer projections stored stacked and lane-concatenated:
    #   w_q1   (L, D, D)   : query of point tokens (direction 1)
    #   w_part (L, D, 3D)  : [k1 | v1 | q2] applied to the part tokens
    #   w_pt2  (L, D, 2D)  : [k2 | v2]      applied to the updated point tokens
    ks = jax.random.split(key, 6)

    def nrm(k, shape, s=0.05):
        return jax.random.normal(k, shape, jnp.float32) * s

    return dict(
        w_q1=nrm(ks[0], (n_layers, h, h)),
        b_q1=nrm(ks[1], (n_layers, 1, h), 0.01),
        w_part=nrm(ks[2], (n_layers, h, 3 * h)),
        b_part=nrm(ks[3], (n_layers, 1, 3 * h), 0.01),
        w_pt2=nrm(ks[4], (n_layers, h, 2 * h)),
        b_pt2=nrm(ks[5], (n_layers, 1, 2 * h), 0.01),
    )


def init_gpat(key, hidden_dim=32, n_layers=8):
    k0, k1, k2, k3, k4 = jax.random.split(key, 5)
    return dict(
        target_pointnet=init_pointnet(k0, hidden_dim),
        part_pointnet=init_pointnet(k1, hidden_dim - 1),
        attn_stack=init_attention_stack(k2, hidden_dim, n_layers),
        Wq=init_ff(k3, hidden_dim),
        Wk=init_ff(k4, hidden_dim),
    )


# ----------------------------------------------------------------------------
# Module forward passes (glue in plain JAX, compute in Pallas, all under one jit)
# ----------------------------------------------------------------------------
def target_encoder_apply(pointnet_params, pc, stride=10):
    # TODO(synk): original Downsample source unavailable; stride-based subsampling used.
    # Subsample BEFORE PointNet: the per-point MLP commutes with indexing, so only the
    # kept rows are ever computed (identical result, 10x fewer matmul rows).
    B, N, _ = pc.shape
    idx = jnp.arange(0, N, stride)
    points = pc[:, idx, :]                              # (B, M, 3)
    point_tokens = pointnet_apply(pointnet_params, points)
    point_idx = jnp.broadcast_to(idx[None, :], (B, idx.shape[0]))
    return point_tokens, points, point_idx


def part_encoder_apply(pointnet_params, pc, embed_key):
    B, K, N, _ = pc.shape
    feat = pointnet_apply(pointnet_params, pc.reshape(B * K, N, 3))  # (B*K, N, h-1)
    pc_enc = jnp.max(feat, axis=1).reshape(B, K, -1)
    # TODO(synk): torch.randperm is nondeterministic; replaced with a vectorized
    # argsort-of-uniform permutation per batch (valid permutation, fully inside jit).
    u = jax.random.uniform(embed_key, (B, K))
    perms = jnp.argsort(u, axis=-1).astype(jnp.float32) + 1.0
    instance_embed = perms[..., None]                   # (B, K, 1)
    return jnp.concatenate([pc_enc, instance_embed], axis=2)


@jax.jit
def gpat_apply(params, part_pcs, target_pc, mask, embed_key):
    point_tokens, points, point_idx = target_encoder_apply(
        params["target_pointnet"], target_pc)
    part_tokens = part_encoder_apply(params["part_pointnet"], part_pcs, embed_key)

    B, K = mask.shape
    mask_bias = (mask.astype(jnp.float32) * (-1e9)).reshape(B, 1, K)

    # TODO(synk): original AttentionLayer (k-NN neighbor attention / use_tf variant)
    # source unavailable; implemented as bidirectional global cross-attention with
    # residuals ("points" unused), all 8 layers fused into a single pallas_call.
    point_tokens, part_tokens = attention_stack_apply(
        params["attn_stack"], point_tokens, part_tokens, mask_bias)

    prob = segmentation_head_apply(
        {"Wq": params["Wq"], "Wk": params["Wk"]}, point_tokens, part_tokens, mask_bias)
    return prob, point_idx


# ----------------------------------------------------------------------------
if __name__ == "__main__":
    key = jax.random.PRNGKey(0)
    k_part, k_tgt, k_par, k_emb = jax.random.split(key, 4)

    B, K, Np, Nt, H = 2, 4, 16, 160, 32   # stride-10 downsample -> 16 point tokens
    part_pcs = jax.random.normal(k_part, (B, K, Np, 3), jnp.float32)
    target_pc = jax.random.normal(k_tgt, (B, Nt, 3), jnp.float32)
    mask = jnp.zeros((B, K), jnp.float32).at[1, 3].set(1.0)   # one padded part in batch 1

    params = init_gpat(k_par, hidden_dim=H, n_layers=8)
    prob, point_idx = gpat_apply(params, part_pcs, target_pc, mask, k_emb)
    jax.block_until_ready((prob, point_idx))

    assert prob.shape == (B, Nt // 10, K)
    assert point_idx.shape == (B, Nt // 10)
    assert bool(jnp.all(jnp.isfinite(prob)))
    # softmax rows sum to 1
    assert bool(jnp.allclose(jnp.sum(prob, axis=-1), 1.0, atol=1e-4))
    print("KERNEL_OK")
</pallas_src>

<mosaic_0001>
module attributes {stable_mosaic.version = 11 : i64} {
  func.func @_pointnet_kernel(%arg0: i32, %arg1: memref<32x3xf32, #tpu.memory_space<vmem>>, %arg2: memref<3x64xf32, #tpu.memory_space<vmem>>, %arg3: memref<1x64xf32, #tpu.memory_space<vmem>>, %arg4: memref<64x32xf32, #tpu.memory_space<vmem>>, %arg5: memref<1x32xf32, #tpu.memory_space<vmem>>, %arg6: memref<32x32xf32, #tpu.memory_space<vmem>>) attributes {dimension_semantics = [#tpu.dimension_semantics<parallel>], iteration_bounds = array<i64: 1>, scalar_prefetch = 0 : i64, scratch_operands = 0 : i64, tpu.core_type = #tpu.core_type<tc>, window_params = [{transform_indices = @transform_0, window_bounds = array<i64: 32, 3>}, {pipeline_mode = #tpu.pipeline_mode<synchronous>, transform_indices = @transform_1, window_bounds = array<i64: 3, 64>}, {pipeline_mode = #tpu.pipeline_mode<synchronous>, transform_indices = @transform_2, window_bounds = array<i64: 1, 64>}, {pipeline_mode = #tpu.pipeline_mode<synchronous>, transform_indices = @transform_3, window_bounds = array<i64: 64, 32>}, {pipeline_mode = #tpu.pipeline_mode<synchronous>, transform_indices = @transform_4, window_bounds = array<i64: 1, 32>}, {transform_indices = @transform_5, window_bounds = array<i64: 32, 32>}]} {
    %c0 = arith.constant 0 : index
    %c0_0 = arith.constant 0 : index
    %0 = vector.load %arg1[%c0, %c0_0] : memref<32x3xf32, #tpu.memory_space<vmem>>, vector<32x3xf32>
    %c0_1 = arith.constant 0 : index
    %c0_2 = arith.constant 0 : index
    %1 = vector.load %arg2[%c0_1, %c0_2] : memref<3x64xf32, #tpu.memory_space<vmem>>, vector<3x64xf32>
    %2 = vector.extract_strided_slice %0 {offsets = [0, 0], sizes = [32, 1], strides = [1, 1]} : vector<32x3xf32> to vector<32x1xf32>
    %3 = vector.extract_strided_slice %1 {offsets = [0, 0], sizes = [1, 64], strides = [1, 1]} : vector<3x64xf32> to vector<1x64xf32>
    %4 = vector.broadcast %2 : vector<32x1xf32> to vector<32x64xf32>
    %5 = vector.broadcast %3 : vector<1x64xf32> to vector<32x64xf32>
    %6 = arith.mulf %4, %5 : vector<32x64xf32>
    %7 = vector.extract_strided_slice %0 {offsets = [0, 1], sizes = [32, 1], strides = [1, 1]} : vector<32x3xf32> to vector<32x1xf32>
    %8 = vector.extract_strided_slice %1 {offsets = [1, 0], sizes = [1, 64], strides = [1, 1]} : vector<3x64xf32> to vector<1x64xf32>
    %9 = vector.broadcast %7 : vector<32x1xf32> to vector<32x64xf32>
    %10 = vector.broadcast %8 : vector<1x64xf32> to vector<32x64xf32>
    %11 = arith.mulf %9, %10 : vector<32x64xf32>
    %12 = arith.addf %6, %11 : vector<32x64xf32>
    %13 = vector.extract_strided_slice %0 {offsets = [0, 2], sizes = [32, 1], strides = [1, 1]} : vector<32x3xf32> to vector<32x1xf32>
    %14 = vector.extract_strided_slice %1 {offsets = [2, 0], sizes = [1, 64], strides = [1, 1]} : vector<3x64xf32> to vector<1x64xf32>
    %15 = vector.broadcast %13 : vector<32x1xf32> to vector<32x64xf32>
    %16 = vector.broadcast %14 : vector<1x64xf32> to vector<32x64xf32>
    %17 = arith.mulf %15, %16 : vector<32x64xf32>
    %18 = arith.addf %12, %17 : vector<32x64xf32>
    %c0_3 = arith.constant 0 : index
    %c0_4 = arith.constant 0 : index
    %19 = vector.load %arg3[%c0_3, %c0_4] : memref<1x64xf32, #tpu.memory_space<vmem>>, vector<1x64xf32>
    %20 = vector.broadcast %19 : vector<1x64xf32> to vector<32x64xf32>
    %21 = arith.addf %18, %20 : vector<32x64xf32>
    %cst = arith.constant 0.000000e+00 : f32
    %22 = vector.broadcast %cst : f32 to vector<32x64xf32>
    %23 = arith.maximumf %21, %22 : vector<32x64xf32>
    %c0_5 = arith.constant 0 : index
    %c0_6 = arith.constant 0 : index
    %24 = vector.load %arg4[%c0_5, %c0_6] : memref<64x32xf32, #tpu.memory_space<vmem>>, vector<64x32xf32>
    %cst_7 = arith.constant dense<0.000000e+00> : vector<32x32xf32>
    %25 = tpu.matmul %23, %24, %cst_7 {dimension_numbers = #tpu.dot_dimension_numbers<[1], [0], [0], [1], [0, 0, 1, 1], [], []>} : vector<32x64xf32>, vector<64x32xf32>, vector<32x32xf32> -> vector<32x32xf32>
    %c0_8 = arith.constant 0 : index
    %c0_9 = arith.constant 0 : index
    %26 = vector.load %arg5[%c0_8, %c0_9] : memref<1x32xf32, #tpu.memory_space<vmem>>, vector<1x32xf32>
    %27 = vector.broadcast %26 : vector<1x32xf32> to vector<32x32xf32>
    %28 = arith.addf %25, %27 : vector<32x32xf32>
    %c0_10 = arith.constant 0 : index
    %c0_11 = arith.constant 0 : index
    %29 = vector.load %arg6[%c0_10, %c0_11] : memref<32x32xf32, #tpu.memory_space<vmem>>, vector<32x32xf32>
    tpu.vector_store %arg6[%c0_10, %c0_11], %28 {strides = array<i32>} : memref<32x32xf32, #tpu.memory_space<vmem>>, vector<32x32xf32>,
    return
  }
  func.func @transform_0(%arg0: i32) -> (i32, i32) {
    %c0_i32 = arith.constant 0 : i32
    %c0_i32_0 = arith.constant 0 : i32
    return %arg0, %c0_i32 : i32, i32
  }
  func.func @transform_1(%arg0: i32) -> (i32, i32) {
    %c0_i32 = arith.constant 0 : i32
    %c0_i32_0 = arith.constant 0 : i32
    %c0_i32_1 = arith.constant 0 : i32
    return %c0_i32, %c0_i32_0 : i32, i32
  }
  func.func @transform_2(%arg0: i32) -> (i32, i32) {
    %c0_i32 = arith.constant 0 : i32
    %c0_i32_0 = arith.constant 0 : i32
    %c0_i32_1 = arith.constant 0 : i32
    return %c0_i32, %c0_i32_0 : i32, i32
  }
  func.func @transform_3(%arg0: i32) -> (i32, i32) {
    %c0_i32 = arith.constant 0 : i32
    %c0_i32_0 = arith.constant 0 : i32
    %c0_i32_1 = arith.constant 0 : i32
    return %c0_i32, %c0_i32_0 : i32, i32
  }
  func.func @transform_4(%arg0: i32) -> (i32, i32) {
    %c0_i32 = arith.constant 0 : i32
    %c0_i32_0 = arith.constant 0 : i32
    %c0_i32_1 = arith.constant 0 : i32
    return %c0_i32, %c0_i32_0 : i32, i32
  }
  func.func @transform_5(%arg0: i32) -> (i32, i32) {
    %c0_i32 = arith.constant 0 : i32
    %c0_i32_0 = arith.constant 0 : i32
    return %arg0, %c0_i32 : i32, i32
  }
}

module attributes {stable_mosaic.version = 11 : i64} {
  func.func @_pointnet_kernel(%arg0: i32, %arg1: memref<128x3xf32, #tpu.memory_space<vmem>>, %arg2: memref<3x64xf32, #tpu.memory_space<vmem>>, %arg3: memref<1x64xf32, #tpu.memory_space<vmem>>, %arg4: memref<64x31xf32, #tpu.memory_space<vmem>>, %arg5: memref<1x31xf32, #tpu.memory_space<vmem>>, %arg6: memref<128x31xf32, #tpu.memory_space<vmem>>) attributes {dimension_semantics = [#tpu.dimension_semantics<parallel>], iteration_bounds = array<i64: 1>, scalar_prefetch = 0 : i64, scratch_operands = 0 : i64, tpu.core_type = #tpu.core_type<tc>, window_params = [{transform_indices = @transform_0, window_bounds = array<i64: 128, 3>}, {pipeline_mode = #tpu.pipeline_mode<synchronous>, transform_indices = @transform_1, window_bounds = array<i64: 3, 64>}, {pipeline_mode = #tpu.pipeline_mode<synchronous>, transform_indices = @transform_2, window_bounds = array<i64: 1, 64>}, {pipeline_mode = #tpu.pipeline_mode<synchronous>, transform_indices = @transform_3, window_bounds = array<i64: 64, 31>}, {pipeline_mode = #tpu.pipeline_mode<synchronous>, transform_indices = @transform_4, window_bounds = array<i64: 1, 31>}, {transform_indices = @transform_5, window_bounds = array<i64: 128, 31>}]} {
    %c0 = arith.constant 0 : index
    %c0_0 = arith.constant 0 : index
    %0 = vector.load %arg1[%c0, %c0_0] : memref<128x3xf32, #tpu.memory_space<vmem>>, vector<128x3xf32>
    %c0_1 = arith.constant 0 : index
    %c0_2 = arith.constant 0 : index
    %1 = vector.load %arg2[%c0_1, %c0_2] : memref<3x64xf32, #tpu.memory_space<vmem>>, vector<3x64xf32>
    %2 = vector.extract_strided_slice %0 {offsets = [0, 0], sizes = [128, 1], strides = [1, 1]} : vector<128x3xf32> to vector<128x1xf32>
    %3 = vector.extract_strided_slice %1 {offsets = [0, 0], sizes = [1, 64], strides = [1, 1]} : vector<3x64xf32> to vector<1x64xf32>
    %4 = vector.broadcast %2 : vector<128x1xf32> to vector<128x64xf32>
    %5 = vector.broadcast %3 : vector<1x64xf32> to vector<128x64xf32>
    %6 = arith.mulf %4, %5 : vector<128x64xf32>
    %7 = vector.extract_strided_slice %0 {offsets = [0, 1], sizes = [128, 1], strides = [1, 1]} : vector<128x3xf32> to vector<128x1xf32>
    %8 = vector.extract_strided_slice %1 {offsets = [1, 0], sizes = [1, 64], strides = [1, 1]} : vector<3x64xf32> to vector<1x64xf32>
    %9 = vector.broadcast %7 : vector<128x1xf32> to vector<128x64xf32>
    %10 = vector.broadcast %8 : vector<1x64xf32> to vector<128x64xf32>
    %11 = arith.mulf %9, %10 : vector<128x64xf32>
    %12 = arith.addf %6, %11 : vector<128x64xf32>
    %13 = vector.extract_strided_slice %0 {offsets = [0, 2], sizes = [128, 1], strides = [1, 1]} : vector<128x3xf32> to vector<128x1xf32>
    %14 = vector.extract_strided_slice %1 {offsets = [2, 0], sizes = [1, 64], strides = [1, 1]} : vector<3x64xf32> to vector<1x64xf32>
    %15 = vector.broadcast %13 : vector<128x1xf32> to vector<128x64xf32>
    %16 = vector.broadcast %14 : vector<1x64xf32> to vector<128x64xf32>
    %17 = arith.mulf %15, %16 : vector<128x64xf32>
    %18 = arith.addf %12, %17 : vector<128x64xf32>
    %c0_3 = arith.constant 0 : index
    %c0_4 = arith.constant 0 : index
    %19 = vector.load %arg3[%c0_3, %c0_4] : memref<1x64xf32, #tpu.memory_space<vmem>>, vector<1x64xf32>
    %20 = vector.broadcast %19 : vector<1x64xf32> to vector<128x64xf32>
    %21 = arith.addf %18, %20 : vector<128x64xf32>
    %cst = arith.constant 0.000000e+00 : f32
    %22 = vector.broadcast %cst : f32 to vector<128x64xf32>
    %23 = arith.maximumf %21, %22 : vector<128x64xf32>
    %c0_5 = arith.constant 0 : index
    %c0_6 = arith.constant 0 : index
    %24 = vector.load %arg4[%c0_5, %c0_6] : memref<64x31xf32, #tpu.memory_space<vmem>>, vector<64x31xf32>
    %cst_7 = arith.constant dense<0.000000e+00> : vector<128x31xf32>
    %25 = tpu.matmul %23, %24, %cst_7 {dimension_numbers = #tpu.dot_dimension_numbers<[1], [0], [0], [1], [0, 0, 1, 1], [], []>} : vector<128x64xf32>, vector<64x31xf32>, vector<128x31xf32> -> vector<128x31xf32>
    %c0_8 = arith.constant 0 : index
    %c0_9 = arith.constant 0 : index
    %26 = vector.load %arg5[%c0_8, %c0_9] : memref<1x31xf32, #tpu.memory_space<vmem>>, vector<1x31xf32>
    %27 = vector.broadcast %26 : vector<1x31xf32> to vector<128x31xf32>
    %28 = arith.addf %25, %27 : vector<128x31xf32>
    %c0_10 = arith.constant 0 : index
    %c0_11 = arith.constant 0 : index
    %29 = vector.load %arg6[%c0_10, %c0_11] : memref<128x31xf32, #tpu.memory_space<vmem>>, vector<128x31xf32>
    tpu.vector_store %arg6[%c0_10, %c0_11], %28 {strides = array<i32>} : memref<128x31xf32, #tpu.memory_space<vmem>>, vector<128x31xf32>,
    return
  }
  func.func @transform_0(%arg0: i32) -> (i32, i32) {
    %c0_i32 = arith.constant 0 : i32
    %c0_i32_0 = arith.constant 0 : i32
    return %arg0, %c0_i32 : i32, i32
  }
  func.func @transform_1(%arg0: i32) -> (i32, i32) {
    %c0_i32 = arith.constant 0 : i32
    %c0_i32_0 = arith.constant 0 : i32
    %c0_i32_1 = arith.constant 0 : i32
    return %c0_i32, %c0_i32_0 : i32, i32
  }
  func.func @transform_2(%arg0: i32) -> (i32, i32) {
    %c0_i32 = arith.constant 0 : i32
    %c0_i32_0 = arith.constant 0 : i32
    %c0_i32_1 = arith.constant 0 : i32
    return %c0_i32, %c0_i32_0 : i32, i32
  }
  func.func @transform_3(%arg0: i32) -> (i32, i32) {
    %c0_i32 = arith.constant 0 : i32
    %c0_i32_0 = arith.constant 0 : i32
    %c0_i32_1 = arith.constant 0 : i32
    return %c0_i32, %c0_i32_0 : i32, i32
  }
  func.func @transform_4(%arg0: i32) -> (i32, i32) {
    %c0_i32 = arith.constant 0 : i32
    %c0_i32_0 = arith.constant 0 : i32
    %c0_i32_1 = arith.constant 0 : i32
    return %c0_i32, %c0_i32_0 : i32, i32
  }
  func.func @transform_5(%arg0: i32) -> (i32, i32) {
    %c0_i32 = arith.constant 0 : i32
    %c0_i32_0 = arith.constant 0 : i32
    return %arg0, %c0_i32 : i32, i32
  }
}

module attributes {stable_mosaic.version = 11 : i64} {
  func.func @_attn_stack_kernel(%arg0: i32, %arg1: i32, %arg2: memref<1x16x32xf32, #tpu.memory_space<vmem>>, %arg3: memref<1x4x32xf32, #tpu.memory_space<vmem>>, %arg4: memref<1x1x4xf32, #tpu.memory_space<vmem>>, %arg5: memref<1x32x32xf32, #tpu.memory_space<vmem>>, %arg6: memref<1x1x32xf32, #tpu.memory_space<vmem>>, %arg7: memref<1x32x96xf32, #tpu.memory_space<vmem>>, %arg8: memref<1x1x96xf32, #tpu.memory_space<vmem>>, %arg9: memref<1x32x64xf32, #tpu.memory_space<vmem>>, %arg10: memref<1x1x64xf32, #tpu.memory_space<vmem>>, %arg11: memref<1x16x32xf32, #tpu.memory_space<vmem>>, %arg12: memref<1x4x32xf32, #tpu.memory_space<vmem>>, %arg13: memref<16x32xf32, #tpu.memory_space<vmem>>, %arg14: memref<4x32xf32, #tpu.memory_space<vmem>>) attributes {dimension_semantics = [#tpu.dimension_semantics<parallel>, #tpu.dimension_semantics<arbitrary>], iteration_bounds = array<i64: 2, 8>, scalar_prefetch = 0 : i64, scratch_operands = 2 : i64, tpu.core_type = #tpu.core_type<tc>, window_params = [{transform_indices = @transform_0, window_bounds = array<i64: 1, 16, 32>}, {transform_indices = @transform_1, window_bounds = array<i64: 1, 4, 32>}, {transform_indices = @transform_2, window_bounds = array<i64: 1, 1, 4>}, {transform_indices = @transform_3, window_bounds = array<i64: 1, 32, 32>}, {transform_indices = @transform_4, window_bounds = array<i64: 1, 1, 32>}, {transform_indices = @transform_5, window_bounds = array<i64: 1, 32, 96>}, {transform_indices = @transform_6, window_bounds = array<i64: 1, 1, 96>}, {transform_indices = @transform_7, window_bounds = array<i64: 1, 32, 64>}, {transform_indices = @transform_8, window_bounds = array<i64: 1, 1, 64>}, {transform_indices = @transform_9, window_bounds = array<i64: 1, 16, 32>}, {transform_indices = @transform_10, window_bounds = array<i64: 1, 4, 32>}]} {
    %c0_i32 = arith.constant 0 : i32
    %0 = arith.cmpi eq, %arg1, %c0_i32 : i32
    %1 = arith.extui %0 : i1 to i32
    %c0_i32_0 = arith.constant 0 : i32
    %2 = arith.cmpi ne, %1, %c0_i32_0 : i32
    scf.if %2 {
      %c0_42 = arith.constant 0 : index
      %c0_43 = arith.constant 0 : index
      %c0_44 = arith.constant 0 : index
      %70 = vector.load %arg2[%c0_42, %c0_43, %c0_44] : memref<1x16x32xf32, #tpu.memory_space<vmem>>, vector<1x16x32xf32>
      %71 = vector.shape_cast %70 : vector<1x16x32xf32> to vector<16x32xf32>
      %c0_45 = arith.constant 0 : index
      %c0_46 = arith.constant 0 : index
      %72 = vector.load %arg13[%c0_45, %c0_46] : memref<16x32xf32, #tpu.memory_space<vmem>>, vector<16x32xf32>
      tpu.vector_store %arg13[%c0_45, %c0_46], %71 {strides = array<i32>} : memref<16x32xf32, #tpu.memory_space<vmem>>, vector<16x32xf32>,
      %c0_47 = arith.constant 0 : index
      %c0_48 = arith.constant 0 : index
      %c0_49 = arith.constant 0 : index
      %73 = vector.load %arg3[%c0_47, %c0_48, %c0_49] : memref<1x4x32xf32, #tpu.memory_space<vmem>>, vector<1x4x32xf32>
      %74 = vector.shape_cast %73 : vector<1x4x32xf32> to vector<4x32xf32>
      %c0_50 = arith.constant 0 : index
      %c0_51 = arith.constant 0 : index
      %75 = vector.load %arg14[%c0_50, %c0_51] : memref<4x32xf32, #tpu.memory_space<vmem>>, vector<4x32xf32>
      tpu.vector_store %arg14[%c0_50, %c0_51], %74 {strides = array<i32>} : memref<4x32xf32, #tpu.memory_space<vmem>>, vector<4x32xf32>,
    } else {
    }
    %c0 = arith.constant 0 : index
    %c0_1 = arith.constant 0 : index
    %3 = vector.load %arg13[%c0, %c0_1] : memref<16x32xf32, #tpu.memory_space<vmem>>, vector<16x32xf32>
    %c0_2 = arith.constant 0 : index
    %c0_3 = arith.constant 0 : index
    %4 = vector.load %arg14[%c0_2, %c0_3] : memref<4x32xf32, #tpu.memory_space<vmem>>, vector<4x32xf32>
    %c0_4 = arith.constant 0 : index
    %c0_5 = arith.constant 0 : index
    %c0_6 = arith.constant 0 : index
    %5 = vector.load %arg4[%c0_4, %c0_5, %c0_6] : memref<1x1x4xf32, #tpu.memory_space<vmem>>, vector<1x1x4xf32>
    %6 = vector.shape_cast %5 : vector<1x1x4xf32> to vector<1x4xf32>
    %c0_7 = arith.constant 0 : index
    %c0_8 = arith.constant 0 : index
    %c0_9 = arith.constant 0 : index
    %7 = vector.load %arg7[%c0_7, %c0_8, %c0_9] : memref<1x32x96xf32, #tpu.memory_space<vmem>>, vector<1x32x96xf32>
    %8 = vector.shape_cast %7 : vector<1x32x96xf32> to vector<32x96xf32>
    %cst = arith.constant dense<0.000000e+00> : vector<4x96xf32>
    %9 = tpu.matmul %4, %8, %cst {dimension_numbers = #tpu.dot_dimension_numbers<[1], [0], [0], [1], [0, 0, 1, 1], [], []>} : vector<4x32xf32>, vector<32x96xf32>, vector<4x96xf32> -> vector<4x96xf32>
    %c0_10 = arith.constant 0 : index
    %c0_11 = arith.constant 0 : index
    %c0_12 = arith.constant 0 : index
    %10 = vector.load %arg8[%c0_10, %c0_11, %c0_12] : memref<1x1x96xf32, #tpu.memory_space<vmem>>, vector<1x1x96xf32>
    %11 = vector.shape_cast %10 : vector<1x1x96xf32> to vector<1x96xf32>
    %12 = vector.broadcast %11 : vector<1x96xf32> to vector<4x96xf32>
    %13 = arith.addf %9, %12 : vector<4x96xf32>
    %14 = vector.extract_strided_slice %13 {offsets = [0, 0], sizes = [4, 32], strides = [1, 1]} : vector<4x96xf32> to vector<4x32xf32>
    %15 = vector.extract_strided_slice %13 {offsets = [0, 32], sizes = [4, 32], strides = [1, 1]} : vector<4x96xf32> to vector<4x32xf32>
    %16 = vector.extract_strided_slice %13 {offsets = [0, 64], sizes = [4, 32], strides = [1, 1]} : vector<4x96xf32> to vector<4x32xf32>
    %c0_13 = arith.constant 0 : index
    %c0_14 = arith.constant 0 : index
    %c0_15 = arith.constant 0 : index
    %17 = vector.load %arg5[%c0_13, %c0_14, %c0_15] : memref<1x32x32xf32, #tpu.memory_space<vmem>>, vector<1x32x32xf32>
    %18 = vector.shape_cast %17 : vector<1x32x32xf32> to vector<32x32xf32>
    %cst_16 = arith.constant dense<0.000000e+00> : vector<16x32xf32>
    %19 = tpu.matmul %3, %18, %cst_16 {dimension_numbers = #tpu.dot_dimension_numbers<[1], [0], [0], [1], [0, 0, 1, 1], [], []>} : vector<16x32xf32>, vector<32x32xf32>, vector<16x32xf32> -> vector<16x32xf32>
    %c0_17 = arith.constant 0 : index
    %c0_18 = arith.constant 0 : index
    %c0_19 = arith.constant 0 : index
    %20 = vector.load %arg6[%c0_17, %c0_18, %c0_19] : memref<1x1x32xf32, #tpu.memory_space<vmem>>, vector<1x1x32xf32>
    %21 = vector.shape_cast %20 : vector<1x1x32xf32> to vector<1x32xf32>
    %22 = vector.broadcast %21 : vector<1x32xf32> to vector<16x32xf32>
    %23 = arith.addf %19, %22 : vector<16x32xf32>
    %cst_20 = arith.constant dense<0.000000e+00> : vector<16x4xf32>
    %24 = tpu.matmul %23, %14, %cst_20 {dimension_numbers = #tpu.dot_dimension_numbers<[1], [1], [0], [0], [0, 0, 1, 0], [], []>} : vector<16x32xf32>, vector<4x32xf32>, vector<16x4xf32> -> vector<16x4xf32>
    %cst_21 = arith.constant 0.176776692 : f32
    %25 = vector.broadcast %cst_21 : f32 to vector<16x4xf32>
    %26 = arith.mulf %24, %25 : vector<16x4xf32>
    %27 = vector.broadcast %6 : vector<1x4xf32> to vector<16x4xf32>
    %28 = arith.addf %26, %27 : vector<16x4xf32>
    %cst_22 = arith.constant dense<0xFF800000> : vector<16xf32>
    %29 = vector.multi_reduction <maximumf>, %28, %cst_22 [1] : vector<16x4xf32> to vector<16xf32>
    %30 = vector.shape_cast %29 : vector<16xf32> to vector<16x1xf32>
    %31 = vector.broadcast %30 : vector<16x1xf32> to vector<16x4xf32>
    %32 = arith.subf %28, %31 : vector<16x4xf32>
    %33 = math.exp %32 : vector<16x4xf32>
    %cst_23 = arith.constant dense<0.000000e+00> : vector<16xf32>
    %34 = vector.multi_reduction <add>, %33, %cst_23 [1] : vector<16x4xf32> to vector<16xf32>
    %35 = vector.shape_cast %34 : vector<16xf32> to vector<16x1xf32>
    %36 = tpu.reciprocal %35 {approx = true} : vector<16x1xf32> -> vector<16x1xf32>
    %37 = vector.broadcast %36 : vector<16x1xf32> to vector<16x4xf32>
    %38 = arith.mulf %33, %37 : vector<16x4xf32>
    %cst_24 = arith.constant dense<0.000000e+00> : vector<16x32xf32>
    %39 = tpu.matmul %38, %15, %cst_24 {dimension_numbers = #tpu.dot_dimension_numbers<[1], [0], [0], [1], [0, 0, 1, 1], [], []>} : vector<16x4xf32>, vector<4x32xf32>, vector<16x32xf32> -> vector<16x32xf32>
    %40 = arith.addf %3, %39 : vector<16x32xf32>
    %c0_25 = arith.constant 0 : index
    %c0_26 = arith.constant 0 : index
    %c0_27 = arith.constant 0 : index
    %41 = vector.load %arg9[%c0_25, %c0_26, %c0_27] : memref<1x32x64xf32, #tpu.memory_space<vmem>>, vector<1x32x64xf32>
    %42 = vector.shape_cast %41 : vector<1x32x64xf32> to vector<32x64xf32>
    %cst_28 = arith.constant dense<0.000000e+00> : vector<16x64xf32>
    %43 = tpu.matmul %40, %42, %cst_28 {dimension_numbers = #tpu.dot_dimension_numbers<[1], [0], [0], [1], [0, 0, 1, 1], [], []>} : vector<16x32xf32>, vector<32x64xf32>, vector<16x64xf32> -> vector<16x64xf32>
    %c0_29 = arith.constant 0 : index
    %c0_30 = arith.constant 0 : index
    %c0_31 = arith.constant 0 : index
    %44 = vector.load %arg10[%c0_29, %c0_30, %c0_31] : memref<1x1x64xf32, #tpu.memory_space<vmem>>, vector<1x1x64xf32>
    %45 = vector.shape_cast %44 : vector<1x1x64xf32> to vector<1x64xf32>
    %46 = vector.broadcast %45 : vector<1x64xf32> to vector<16x64xf32>
    %47 = arith.addf %43, %46 : vector<16x64xf32>
    %48 = vector.extract_strided_slice %47 {offsets = [0, 0], sizes = [16, 32], strides = [1, 1]} : vector<16x64xf32> to vector<16x32xf32>
    %49 = vector.extract_strided_slice %47 {offsets = [0, 32], sizes = [16, 32], strides = [1, 1]} : vector<16x64xf32> to vector<16x32xf32>
    %cst_32 = arith.constant dense<0.000000e+00> : vector<4x16xf32>
    %50 = tpu.matmul %16, %48, %cst_32 {dimension_numbers = #tpu.dot_dimension_numbers<[1], [1], [0], [0], [0, 0, 1, 0], [], []>} : vector<4x32xf32>, vector<16x32xf32>, vector<4x16xf32> -> vector<4x16xf32>
    %cst_33 = arith.constant 0.176776692 : f32
    %51 = vector.broadcast %cst_33 : f32 to vector<4x16xf32>
    %52 = arith.mulf %50, %51 : vector<4x16xf32>
    %cst_34 = arith.constant dense<0xFF800000> : vector<4xf32>
    %53 = vector.multi_reduction <maximumf>, %52, %cst_34 [1] : vector<4x16xf32> to vector<4xf32>
    %54 = vector.shape_cast %53 : vector<4xf32> to vector<4x1xf32>
    %55 = vector.broadcast %54 : vector<4x1xf32> to vector<4x16xf32>
    %56 = arith.subf %52, %55 : vector<4x16xf32>
    %57 = math.exp %56 : vector<4x16xf32>
    %cst_35 = arith.constant dense<0.000000e+00> : vector<4xf32>
    %58 = vector.multi_reduction <add>, %57, %cst_35 [1] : vector<4x16xf32> to vector<4xf32>
    %59 = vector.shape_cast %58 : vector<4xf32> to vector<4x1xf32>
    %60 = tpu.reciprocal %59 {approx = true} : vector<4x1xf32> -> vector<4x1xf32>
    %61 = vector.broadcast %60 : vector<4x1xf32> to vector<4x16xf32>
    %62 = arith.mulf %57, %61 : vector<4x16xf32>
    %cst_36 = arith.constant dense<0.000000e+00> : vector<4x32xf32>
    %63 = tpu.matmul %62, %49, %cst_36 {dimension_numbers = #tpu.dot_dimension_numbers<[1], [0], [0], [1], [0, 0, 1, 1], [], []>} : vector<4x16xf32>, vector<16x32xf32>, vector<4x32xf32> -> vector<4x32xf32>
    %64 = arith.addf %4, %63 : vector<4x32xf32>
    %c0_37 = arith.constant 0 : index
    %c0_38 = arith.constant 0 : index
    %65 = vector.load %arg13[%c0_37, %c0_38] : memref<16x32xf32, #tpu.memory_space<vmem>>, vector<16x32xf32>
    tpu.vector_store %arg13[%c0_37, %c0_38], %40 {strides = array<i32>} : memref<16x32xf32, #tpu.memory_space<vmem>>, vector<16x32xf32>,
    %c0_39 = arith.constant 0 : index
    %c0_40 = arith.constant 0 : index
    %66 = vector.load %arg14[%c0_39, %c0_40] : memref<4x32xf32, #tpu.memory_space<vmem>>, vector<4x32xf32>
    tpu.vector_store %arg14[%c0_39, %c0_40], %64 {strides = array<i32>} : memref<4x32xf32, #tpu.memory_space<vmem>>, vector<4x32xf32>,
    %c7_i32 = arith.constant 7 : i32
    %67 = arith.cmpi eq, %arg1, %c7_i32 : i32
    %68 = arith.extui %67 : i1 to i32
    %c0_i32_41 = arith.constant 0 : i32
    %69 = arith.cmpi ne, %68, %c0_i32_41 : i32
    scf.if %69 {
      %c0_42 = arith.constant 0 : index
      %c0_43 = arith.constant 0 : index
      %c0_44 = arith.constant 0 : index
      %70 = vector.load %arg11[%c0_42, %c0_43, %c0_44] : memref<1x16x32xf32, #tpu.memory_space<vmem>>, vector<1x16x32xf32>
      %71 = vector.shape_cast %70 : vector<1x16x32xf32> to vector<16x32xf32>
      %72 = vector.shape_cast %40 : vector<16x32xf32> to vector<1x16x32xf32>
      tpu.vector_store %arg11[%c0_42, %c0_43, %c0_44], %72 {strides = array<i32>} : memref<1x16x32xf32, #tpu.memory_space<vmem>>, vector<1x16x32xf32>,
      %c0_45 = arith.constant 0 : index
      %c0_46 = arith.constant 0 : index
      %c0_47 = arith.constant 0 : index
      %73 = vector.load %arg12[%c0_45, %c0_46, %c0_47] : memref<1x4x32xf32, #tpu.memory_space<vmem>>, vector<1x4x32xf32>
      %74 = vector.shape_cast %73 : vector<1x4x32xf32> to vector<4x32xf32>
      %75 = vector.shape_cast %64 : vector<4x32xf32> to vector<1x4x32xf32>
      tpu.vector_store %arg12[%c0_45, %c0_46, %c0_47], %75 {strides = array<i32>} : memref<1x4x32xf32, #tpu.memory_space<vmem>>, vector<1x4x32xf32>,
    } else {
    }
    return
  }
  func.func @transform_0(%arg0: i32, %arg1: i32) -> (i32, i32, i32) {
    %c0_i32 = arith.constant 0 : i32
    %c0_i32_0 = arith.constant 0 : i32
    %c0_i32_1 = arith.constant 0 : i32
    return %arg0, %c0_i32, %c0_i32_0 : i32, i32, i32
  }
  func.func @transform_1(%arg0: i32, %arg1: i32) -> (i32, i32, i32) {
    %c0_i32 = arith.constant 0 : i32
    %c0_i32_0 = arith.constant 0 : i32
    %c0_i32_1 = arith.constant 0 : i32
    return %arg0, %c0_i32, %c0_i32_0 : i32, i32, i32
  }
  func.func @transform_2(%arg0: i32, %arg1: i32) -> (i32, i32, i32) {
    %c0_i32 = arith.constant 0 : i32
    %c0_i32_0 = arith.constant 0 : i32
    %c0_i32_1 = arith.constant 0 : i32
    return %arg0, %c0_i32, %c0_i32_0 : i32, i32, i32
  }
  func.func @transform_3(%arg0: i32, %arg1: i32) -> (i32, i32, i32) {
    %c0_i32 = arith.constant 0 : i32
    %c0_i32_0 = arith.constant 0 : i32
    %c0_i32_1 = arith.constant 0 : i32
    return %arg1, %c0_i32, %c0_i32_0 : i32, i32, i32
  }
  func.func @transform_4(%arg0: i32, %arg1: i32) -> (i32, i32, i32) {
    %c0_i32 = arith.constant 0 : i32
    %c0_i32_0 = arith.constant 0 : i32
    %c0_i32_1 = arith.constant 0 : i32
    return %arg1, %c0_i32, %c0_i32_0 : i32, i32, i32
  }
  func.func @transform_5(%arg0: i32, %arg1: i32) -> (i32, i32, i32) {
    %c0_i32 = arith.constant 0 : i32
    %c0_i32_0 = arith.constant 0 : i32
    %c0_i32_1 = arith.constant 0 : i32
    return %arg1, %c0_i32, %c0_i32_0 : i32, i32, i32
  }
  func.func @transform_6(%arg0: i32, %arg1: i32) -> (i32, i32, i32) {
    %c0_i32 = arith.constant 0 : i32
    %c0_i32_0 = arith.constant 0 : i32
    %c0_i32_1 = arith.constant 0 : i32
    return %arg1, %c0_i32, %c0_i32_0 : i32, i32, i32
  }
  func.func @transform_7(%arg0: i32, %arg1: i32) -> (i32, i32, i32) {
    %c0_i32 = arith.constant 0 : i32
    %c0_i32_0 = arith.constant 0 : i32
    %c0_i32_1 = arith.constant 0 : i32
    return %arg1, %c0_i32, %c0_i32_0 : i32, i32, i32
  }
  func.func @transform_8(%arg0: i32, %arg1: i32) -> (i32, i32, i32) {
    %c0_i32 = arith.constant 0 : i32
    %c0_i32_0 = arith.constant 0 : i32
    %c0_i32_1 = arith.constant 0 : i32
    return %arg1, %c0_i32, %c0_i32_0 : i32, i32, i32
  }
  func.func @transform_9(%arg0: i32, %arg1: i32) -> (i32, i32, i32) {
    %c0_i32 = arith.constant 0 : i32
    %c0_i32_0 = arith.constant 0 : i32
    %c0_i32_1 = arith.constant 0 : i32
    return %arg0, %c0_i32, %c0_i32_0 : i32, i32, i32
  }
  func.func @transform_10(%arg0: i32, %arg1: i32) -> (i32, i32, i32) {
    %c0_i32 = arith.constant 0 : i32
    %c0_i32_0 = arith.constant 0 : i32
    %c0_i32_1 = arith.constant 0 : i32
    return %arg0, %c0_i32, %c0_i32_0 : i32, i32, i32
  }
}

module attributes {stable_mosaic.version = 11 : i64} {
  func.func @_seg_head_kernel(%arg0: i32, %arg1: memref<1x16x32xf32, #tpu.memory_space<vmem>>, %arg2: memref<1x4x32xf32, #tpu.memory_space<vmem>>, %arg3: memref<1x1x4xf32, #tpu.memory_space<vmem>>, %arg4: memref<32x32xf32, #tpu.memory_space<vmem>>, %arg5: memref<1x32xf32, #tpu.memory_space<vmem>>, %arg6: memref<32x32xf32, #tpu.memory_space<vmem>>, %arg7: memref<1x32xf32, #tpu.memory_space<vmem>>, %arg8: memref<32x32xf32, #tpu.memory_space<vmem>>, %arg9: memref<1x32xf32, #tpu.memory_space<vmem>>, %arg10: memref<32x32xf32, #tpu.memory_space<vmem>>, %arg11: memref<1x32xf32, #tpu.memory_space<vmem>>, %arg12: memref<1x16x4xf32, #tpu.memory_space<vmem>>) attributes {dimension_semantics = [#tpu.dimension_semantics<parallel>], iteration_bounds = array<i64: 2>, scalar_prefetch = 0 : i64, scratch_operands = 0 : i64, tpu.core_type = #tpu.core_type<tc>, window_params = [{transform_indices = @transform_0, window_bounds = array<i64: 1, 16, 32>}, {transform_indices = @transform_1, window_bounds = array<i64: 1, 4, 32>}, {transform_indices = @transform_2, window_bounds = array<i64: 1, 1, 4>}, {pipeline_mode = #tpu.pipeline_mode<synchronous>, transform_indices = @transform_3, window_bounds = array<i64: 32, 32>}, {pipeline_mode = #tpu.pipeline_mode<synchronous>, transform_indices = @transform_4, window_bounds = array<i64: 1, 32>}, {pipeline_mode = #tpu.pipeline_mode<synchronous>, transform_indices = @transform_5, window_bounds = array<i64: 32, 32>}, {pipeline_mode = #tpu.pipeline_mode<synchronous>, transform_indices = @transform_6, window_bounds = array<i64: 1, 32>}, {pipeline_mode = #tpu.pipeline_mode<synchronous>, transform_indices = @transform_7, window_bounds = array<i64: 32, 32>}, {pipeline_mode = #tpu.pipeline_mode<synchronous>, transform_indices = @transform_8, window_bounds = array<i64: 1, 32>}, {pipeline_mode = #tpu.pipeline_mode<synchronous>, transform_indices = @transform_9, window_bounds = array<i64: 32, 32>}, {pipeline_mode = #tpu.pipeline_mode<synchronous>, transform_indices = @transform_10, window_bounds = array<i64: 1, 32>}, {transform_indices = @transform_11, window_bounds = array<i64: 1, 16, 4>}]} {
    %c0 = arith.constant 0 : index
    %c0_0 = arith.constant 0 : index
    %c0_1 = arith.constant 0 : index
    %0 = vector.load %arg1[%c0, %c0_0, %c0_1] : memref<1x16x32xf32, #tpu.memory_space<vmem>>, vector<1x16x32xf32>
    %1 = vector.shape_cast %0 : vector<1x16x32xf32> to vector<16x32xf32>
    %c0_2 = arith.constant 0 : index
    %c0_3 = arith.constant 0 : index
    %c0_4 = arith.constant 0 : index
    %2 = vector.load %arg2[%c0_2, %c0_3, %c0_4] : memref<1x4x32xf32, #tpu.memory_space<vmem>>, vector<1x4x32xf32>
    %3 = vector.shape_cast %2 : vector<1x4x32xf32> to vector<4x32xf32>
    %c0_5 = arith.constant 0 : index
    %c0_6 = arith.constant 0 : index
    %c0_7 = arith.constant 0 : index
    %4 = vector.load %arg3[%c0_5, %c0_6, %c0_7] : memref<1x1x4xf32, #tpu.memory_space<vmem>>, vector<1x1x4xf32>
    %5 = vector.shape_cast %4 : vector<1x1x4xf32> to vector<1x4xf32>
    %c0_8 = arith.constant 0 : index
    %c0_9 = arith.constant 0 : index
    %6 = vector.load %arg4[%c0_8, %c0_9] : memref<32x32xf32, #tpu.memory_space<vmem>>, vector<32x32xf32>
    %cst = arith.constant dense<0.000000e+00> : vector<16x32xf32>
    %7 = tpu.matmul %1, %6, %cst {dimension_numbers = #tpu.dot_dimension_numbers<[1], [0], [0], [1], [0, 0, 1, 1], [], []>} : vector<16x32xf32>, vector<32x32xf32>, vector<16x32xf32> -> vector<16x32xf32>
    %c0_10 = arith.constant 0 : index
    %c0_11 = arith.constant 0 : index
    %8 = vector.load %arg5[%c0_10, %c0_11] : memref<1x32xf32, #tpu.memory_space<vmem>>, vector<1x32xf32>
    %9 = vector.broadcast %8 : vector<1x32xf32> to vector<16x32xf32>
    %10 = arith.addf %7, %9 : vector<16x32xf32>
    %cst_12 = arith.constant 0.000000e+00 : f32
    %11 = vector.broadcast %cst_12 : f32 to vector<16x32xf32>
    %12 = arith.maximumf %10, %11 : vector<16x32xf32>
    %c0_13 = arith.constant 0 : index
    %c0_14 = arith.constant 0 : index
    %13 = vector.load %arg6[%c0_13, %c0_14] : memref<32x32xf32, #tpu.memory_space<vmem>>, vector<32x32xf32>
    %cst_15 = arith.constant dense<0.000000e+00> : vector<16x32xf32>
    %14 = tpu.matmul %12, %13, %cst_15 {dimension_numbers = #tpu.dot_dimension_numbers<[1], [0], [0], [1], [0, 0, 1, 1], [], []>} : vector<16x32xf32>, vector<32x32xf32>, vector<16x32xf32> -> vector<16x32xf32>
    %c0_16 = arith.constant 0 : index
    %c0_17 = arith.constant 0 : index
    %15 = vector.load %arg7[%c0_16, %c0_17] : memref<1x32xf32, #tpu.memory_space<vmem>>, vector<1x32xf32>
    %16 = vector.broadcast %15 : vector<1x32xf32> to vector<16x32xf32>
    %17 = arith.addf %14, %16 : vector<16x32xf32>
    %c0_18 = arith.constant 0 : index
    %c0_19 = arith.constant 0 : index
    %18 = vector.load %arg8[%c0_18, %c0_19] : memref<32x32xf32, #tpu.memory_space<vmem>>, vector<32x32xf32>
    %cst_20 = arith.constant dense<0.000000e+00> : vector<4x32xf32>
    %19 = tpu.matmul %3, %18, %cst_20 {dimension_numbers = #tpu.dot_dimension_numbers<[1], [0], [0], [1], [0, 0, 1, 1], [], []>} : vector<4x32xf32>, vector<32x32xf32>, vector<4x32xf32> -> vector<4x32xf32>
    %c0_21 = arith.constant 0 : index
    %c0_22 = arith.constant 0 : index
    %20 = vector.load %arg9[%c0_21, %c0_22] : memref<1x32xf32, #tpu.memory_space<vmem>>, vector<1x32xf32>
    %21 = vector.broadcast %20 : vector<1x32xf32> to vector<4x32xf32>
    %22 = arith.addf %19, %21 : vector<4x32xf32>
    %cst_23 = arith.constant 0.000000e+00 : f32
    %23 = vector.broadcast %cst_23 : f32 to vector<4x32xf32>
    %24 = arith.maximumf %22, %23 : vector<4x32xf32>
    %c0_24 = arith.constant 0 : index
    %c0_25 = arith.constant 0 : index
    %25 = vector.load %arg10[%c0_24, %c0_25] : memref<32x32xf32, #tpu.memory_space<vmem>>, vector<32x32xf32>
    %cst_26 = arith.constant dense<0.000000e+00> : vector<4x32xf32>
    %26 = tpu.matmul %24, %25, %cst_26 {dimension_numbers = #tpu.dot_dimension_numbers<[1], [0], [0], [1], [0, 0, 1, 1], [], []>} : vector<4x32xf32>, vector<32x32xf32>, vector<4x32xf32> -> vector<4x32xf32>
    %c0_27 = arith.constant 0 : index
    %c0_28 = arith.constant 0 : index
    %27 = vector.load %arg11[%c0_27, %c0_28] : memref<1x32xf32, #tpu.memory_space<vmem>>, vector<1x32xf32>
    %28 = vector.broadcast %27 : vector<1x32xf32> to vector<4x32xf32>
    %29 = arith.addf %26, %28 : vector<4x32xf32>
    %cst_29 = arith.constant dense<0.000000e+00> : vector<16x4xf32>
    %30 = tpu.matmul %17, %29, %cst_29 {dimension_numbers = #tpu.dot_dimension_numbers<[1], [1], [0], [0], [0, 0, 1, 0], [], []>} : vector<16x32xf32>, vector<4x32xf32>, vector<16x4xf32> -> vector<16x4xf32>
    %cst_30 = arith.constant 0.176776692 : f32
    %31 = vector.broadcast %cst_30 : f32 to vector<16x4xf32>
    %32 = arith.mulf %30, %31 : vector<16x4xf32>
    %33 = vector.broadcast %5 : vector<1x4xf32> to vector<16x4xf32>
    %34 = arith.addf %32, %33 : vector<16x4xf32>
    %cst_31 = arith.constant dense<0xFF800000> : vector<16xf32>
    %35 = vector.multi_reduction <maximumf>, %34, %cst_31 [1] : vector<16x4xf32> to vector<16xf32>
    %36 = vector.shape_cast %35 : vector<16xf32> to vector<16x1xf32>
    %37 = vector.broadcast %36 : vector<16x1xf32> to vector<16x4xf32>
    %38 = arith.subf %34, %37 : vector<16x4xf32>
    %39 = math.exp %38 : vector<16x4xf32>
    %cst_32 = arith.constant dense<0.000000e+00> : vector<16xf32>
    %40 = vector.multi_reduction <add>, %39, %cst_32 [1] : vector<16x4xf32> to vector<16xf32>
    %41 = vector.shape_cast %40 : vector<16xf32> to vector<16x1xf32>
    %42 = vector.broadcast %41 : vector<16x1xf32> to vector<16x4xf32>
    %43 = arith.divf %39, %42 : vector<16x4xf32>
    %c0_33 = arith.constant 0 : index
    %c0_34 = arith.constant 0 : index
    %c0_35 = arith.constant 0 : index
    %44 = vector.load %arg12[%c0_33, %c0_34, %c0_35] : memref<1x16x4xf32, #tpu.memory_space<vmem>>, vector<1x16x4xf32>
    %45 = vector.shape_cast %44 : vector<1x16x4xf32> to vector<16x4xf32>
    %46 = vector.shape_cast %43 : vector<16x4xf32> to vector<1x16x4xf32>
    tpu.vector_store %arg12[%c0_33, %c0_34, %c0_35], %46 {strides = array<i32>} : memref<1x16x4xf32, #tpu.memory_space<vmem>>, vector<1x16x4xf32>,
    return
  }
  func.func @transform_0(%arg0: i32) -> (i32, i32, i32) {
    %c0_i32 = arith.constant 0 : i32
    %c0_i32_0 = arith.constant 0 : i32
    %c0_i32_1 = arith.constant 0 : i32
    return %arg0, %c0_i32, %c0_i32_0 : i32, i32, i32
  }
  func.func @transform_1(%arg0: i32) -> (i32, i32, i32) {
    %c0_i32 = arith.constant 0 : i32
    %c0_i32_0 = arith.constant 0 : i32
    %c0_i32_1 = arith.constant 0 : i32
    return %arg0, %c0_i32, %c0_i32_0 : i32, i32, i32
  }
  func.func @transform_2(%arg0: i32) -> (i32, i32, i32) {
    %c0_i32 = arith.constant 0 : i32
    %c0_i32_0 = arith.constant 0 : i32
    %c0_i32_1 = arith.constant 0 : i32
    return %arg0, %c0_i32, %c0_i32_0 : i32, i32, i32
  }
  func.func @transform_3(%arg0: i32) -> (i32, i32) {
    %c0_i32 = arith.constant 0 : i32
    %c0_i32_0 = arith.constant 0 : i32
    %c0_i32_1 = arith.constant 0 : i32
    return %c0_i32, %c0_i32_0 : i32, i32
  }
  func.func @transform_4(%arg0: i32) -> (i32, i32) {
    %c0_i32 = arith.constant 0 : i32
    %c0_i32_0 = arith.constant 0 : i32
    %c0_i32_1 = arith.constant 0 : i32
    return %c0_i32, %c0_i32_0 : i32, i32
  }
  func.func @transform_5(%arg0: i32) -> (i32, i32) {
    %c0_i32 = arith.constant 0 : i32
    %c0_i32_0 = arith.constant 0 : i32
    %c0_i32_1 = arith.constant 0 : i32
    return %c0_i32, %c0_i32_0 : i32, i32
  }
  func.func @transform_6(%arg0: i32) -> (i32, i32) {
    %c0_i32 = arith.constant 0 : i32
    %c0_i32_0 = arith.constant 0 : i32
    %c0_i32_1 = arith.constant 0 : i32
    return %c0_i32, %c0_i32_0 : i32, i32
  }
  func.func @transform_7(%arg0: i32) -> (i32, i32) {
    %c0_i32 = arith.constant 0 : i32
    %c0_i32_0 = arith.constant 0 : i32
    %c0_i32_1 = arith.constant 0 : i32
    return %c0_i32, %c0_i32_0 : i32, i32
  }
  func.func @transform_8(%arg0: i32) -> (i32, i32) {
    %c0_i32 = arith.constant 0 : i32
    %c0_i32_0 = arith.constant 0 : i32
    %c0_i32_1 = arith.constant 0 : i32
    return %c0_i32, %c0_i32_0 : i32, i32
  }
  func.func @transform_9(%arg0: i32) -> (i32, i32) {
    %c0_i32 = arith.constant 0 : i32
    %c0_i32_0 = arith.constant 0 : i32
    %c0_i32_1 = arith.constant 0 : i32
    return %c0_i32, %c0_i32_0 : i32, i32
  }
  func.func @transform_10(%arg0: i32) -> (i32, i32) {
    %c0_i32 = arith.constant 0 : i32
    %c0_i32_0 = arith.constant 0 : i32
    %c0_i32_1 = arith.constant 0 : i32
    return %c0_i32, %c0_i32_0 : i32, i32
  }
  func.func @transform_11(%arg0: i32) -> (i32, i32, i32) {
    %c0_i32 = arith.constant 0 : i32
    %c0_i32_0 = arith.constant 0 : i32
    %c0_i32_1 = arith.constant 0 : i32
    return %arg0, %c0_i32, %c0_i32_0 : i32, i32, i32
  }
}

</mosaic_0001>

<llo_original>
// kernel: gpat_apply.4
$region0: #{gpat_apply.4}
  #allocation0 [shape = 'u32[]', space=smem, size = 0x4, offset = 0x4, fixed_abs, tag = 'smem constant byte address 0x4 - core index']
  #allocation1 [shape = 'u32[72,128]{1,0:T(1,128)}', space=vmem, size = 0x9000, scoped, tag = 'internal scratch']
  %s0 = inlined_call_operand.vmem [shape: f32[32,3], index: 0, kind: input, shape index: {}]
  %s1 = inlined_call_operand.vmem [shape: f32[3,64], index: 1, kind: input, shape index: {}]
  %s2 = inlined_call_operand.vmem [shape: f32[1,64], index: 2, kind: input, shape index: {}]
  %s3 = inlined_call_operand.vmem [shape: f32[64,32], index: 3, kind: input, shape index: {}]
  %s4 = inlined_call_operand.vmem [shape: f32[1,32], index: 4, kind: input, shape index: {}]
  %s5 = inlined_call_operand.vmem [shape: f32[32,32], index: 5, kind: output, shape index: {}]
  %s6 = sld [smem:[#allocation0]]
  $region30: #{gpat_apply.4} parent=0
    _
  %s8 = ssub.s32 1, %s6
  %s9 = scalar_select 0, %s8, %s6
  // Predicated region
  $region2: #{gpat_apply.4} parent=0 // pred_check
    _
  $region3: #{gpat_apply.4} parent=0 // pred_check_branch
    %11 = sbr.rel (0) target = $region5
  $region4: #{gpat_apply.4} parent=0 // pred_region
    _
  $region5: #{gpat_apply.4} parent=0 // pred_fallthru
    _
  // Predicated region
  $region6: #{gpat_apply.4} parent=0 // pred_check
    _
  $region7: #{gpat_apply.4} parent=0 // pred_check_branch
    %13 = sbr.rel (0) target = $region9
  $region8: #{gpat_apply.4} parent=0 // pred_region
    _
  $region9: #{gpat_apply.4} parent=0 // pred_fallthru
    _
  // Predicated region
  $region10: #{gpat_apply.4} parent=0 // pred_check
    _
  $region11: #{gpat_apply.4} parent=0 // pred_check_branch
    %15 = sbr.rel (0) target = $region13
  $region12: #{gpat_apply.4} parent=0 // pred_region
    _
  $region13: #{gpat_apply.4} parent=0 // pred_fallthru
    _
  // Predicated region
  $region14: #{gpat_apply.4} parent=0 // pred_check
    _
  $region15: #{gpat_apply.4} parent=0 // pred_check_branch
    %17 = sbr.rel (0) target = $region17
  $region16: #{gpat_apply.4} parent=0 // pred_region
    _
  $region17: #{gpat_apply.4} parent=0 // pred_fallthru
    _
  // Predicated region
  $region18: #{gpat_apply.4} parent=0 // pred_check
    _
  $region19: #{gpat_apply.4} parent=0 // pred_check_branch
    %19 = sbr.rel (0) target = $region21
  $region20: #{gpat_apply.4} parent=0 // pred_region
    _
  $region21: #{gpat_apply.4} parent=0 // pred_fallthru
    _
  %v20 = vld [vmem:[%s0] sm:$0xff]
  %v21 = vld [vmem:[%s0 + $0x8] sm:$0xff]
  %v22 = vld [vmem:[%s0 + $0x10] sm:$0xff]
  %v23 = vld [vmem:[%s0 + $0x18] sm:$0xff]
  %v24 = vld [vmem:[%s1] sm:$0x7]
  %26 = vset.pattern.permute.xlu0 0
  %27 = vperm.xlu0 %26, %v20
  %v28 = vpop.permute.xlu0 %27
  %31 = vset.pattern.permute.xlu0 0
  %32 = vperm.xlu0 %31, %v21
  %v33 = vpop.permute.xlu0 %32
  %36 = vset.pattern.permute.xlu0 0
  %37 = vperm.xlu0 %36, %v22
  %v38 = vpop.permute.xlu0 %37
  %41 = vset.pattern.permute.xlu0 0
  %42 = vperm.xlu0 %41, %v23
  %v43 = vpop.permute.xlu0 %42
  %v45 = vperm.slane %v24, 0
  %v46 = vmul.f32 %v28, %v45
  %v47 = vmul.f32 %v33, %v45
  %v48 = vmul.f32 %v38, %v45
  %v49 = vmul.f32 %v43, %v45
  %50 = vset.pattern.permute.xlu0 1
  %51 = vperm.xlu0 %50, %v20
  %v52 = vpop.permute.xlu0 %51
  %54 = vset.pattern.permute.xlu0 1
  %55 = vperm.xlu0 %54, %v21
  %v56 = vpop.permute.xlu0 %55
  %58 = vset.pattern.permute.xlu0 1
  %59 = vperm.xlu0 %58, %v22
  %v60 = vpop.permute.xlu0 %59
  %62 = vset.pattern.permute.xlu0 1
  %63 = vperm.xlu0 %62, %v23
  %v64 = vpop.permute.xlu0 %63
  %v66 = vperm.slane %v24, 1
  %v67 = vmul.f32 %v52, %v66
  %v68 = vmul.f32 %v56, %v66
  %v69 = vmul.f32 %v60, %v66
  %v70 = vmul.f32 %v64, %v66
  %v71 = vadd.f32 %v46, %v67
  %v72 = vadd.f32 %v47, %v68
  %v73 = vadd.f32 %v48, %v69
  %v74 = vadd.f32 %v49, %v70
  %75 = vset.pattern.permute.xlu0 2
  %76 = vperm.xlu0 %75, %v20
  %v77 = vpop.permute.xlu0 %76
  %79 = vset.pattern.permute.xlu0 2
  %80 = vperm.xlu0 %79, %v21
  %v81 = vpop.permute.xlu0 %80
  %83 = vset.pattern.permute.xlu0 2
  %84 = vperm.xlu0 %83, %v22
  %v85 = vpop.permute.xlu0 %84
  %87 = vset.pattern.permute.xlu0 2
  %88 = vperm.xlu0 %87, %v23
  %v89 = vpop.permute.xlu0 %88
  %v91 = vperm.slane %v24, 2
  %v92 = vmul.f32 %v77, %v91
  %v93 = vmul.f32 %v81, %v91
  %v94 = vmul.f32 %v85, %v91
  %v95 = vmul.f32 %v89, %v91
  %v96 = vadd.f32 %v71, %v92
  %v97 = vadd.f32 %v72, %v93
  %v98 = vadd.f32 %v73, %v94
  %v99 = vadd.f32 %v74, %v95
  %v100 = vld [vmem:[%s2] sm:$0x1]
  %v102 = vperm.slane %v100, 0
  %v104 = vadd.f32 %v96, %v102
  %v105 = vadd.f32 %v97, %v102
  %v106 = vadd.f32 %v98, %v102
  %v107 = vadd.f32 %v99, %v102
  %v108 = vmax.f32 %v104, 0.0
  %v109 = vmax.f32 %v105, 0.0
  %v110 = vmax.f32 %v106, 0.0
  %v111 = vmax.f32 %v107, 0.0
  %v112 = vld [vmem:[%s3] sm:$0xff]
  %v113 = vld [vmem:[%s3 + $0x8] sm:$0xff]
  %v114 = vld [vmem:[%s3 + $0x10] sm:$0xff]
  %v115 = vld [vmem:[%s3 + $0x18] sm:$0xff]
  %v116 = vld [vmem:[%s3 + $0x20] sm:$0xff]
  %v117 = vld [vmem:[%s3 + $0x28] sm:$0xff]
  %v118 = vld [vmem:[%s3 + $0x30] sm:$0xff]
  %v119 = vld [vmem:[%s3 + $0x38] sm:$0xff]
  %v120 = vld [vmem:[%s4] sm:$0x1]
  %v122 = vperm.slane %v120, 0
  %vm124 = vcmask 523264
  %v126 = vsel %vm124, %v108, 0
  %v129 = vsel %vm124, %v109, 0
  %v132 = vsel %vm124, %v110, 0
  %v135 = vsel %vm124, %v111, 0
  %137 = vmatpush.msra.mxu0 0.0
  %138 = vmatpush.msra.mxu0 0.0
  %139 = vmatpush.msra.mxu0 0.0
  %140 = vmatpush.msra.mxu0 0.0
  %141 = vmatpush.msra.mxu0 0.0
  %142 = vmatpush.msra.mxu0 0.0
  %143 = vmatpush.msra.mxu0 0.0
  %144 = vmatpush.msra.mxu0 0.0
  %145 = vmatpush.msra.mxu0 %v119
  %146 = vmatpush.msra.mxu0 %v118
  %147 = vmatpush.msra.mxu0 %v117
  %148 = vmatpush.msra.mxu0 %v116
  %149 = vmatpush.msra.mxu0 %v115
  %150 = vmatpush.msra.mxu0 %v114
  %151 = vmatpush.msra.mxu0 %v113
  %152 = vmatpush.msra.mxu0 %v112
  %153 = vmatmul.f32.gmra.mxu0 %v126
  %v154 = vpop.f32.mrf.mxu0
  %v155 = vadd.f32 %v122, %v154
  %156 = vmatmul.f32.gmra.mxu0 %v129
  %v157 = vpop.f32.mrf.mxu0
  %v158 = vadd.f32 %v122, %v157
  %159 = vmatmul.f32.gmra.mxu0 %v132
  %v160 = vpop.f32.mrf.mxu0
  %v161 = vadd.f32 %v122, %v160
  %162 = vmatmul.f32.gmra.mxu0 %v135
  %v163 = vpop.f32.mrf.mxu0
  %v164 = vadd.f32 %v122, %v163
  %165 = vdwg.mxu0
  %vm166 = vcmask 261120
  %167 = vst.msk [vmem:[%s5] sm:$0xff] %vm166, %v155
  %168 = vst.msk [vmem:[%s5 + $0x8] sm:$0xff] %vm166, %v158
  %169 = vst.msk [vmem:[%s5 + $0x10] sm:$0xff] %vm166, %v161
  %170 = vst.msk [vmem:[%s5 + $0x18] sm:$0xff] %vm166, %v164
  // Predicated region
  $region22: #{gpat_apply.4} parent=0 // pred_check
    _
  $region23: #{gpat_apply.4} parent=0 // pred_check_branch
    %172 = sbr.rel (0) target = $region25
  $region24: #{gpat_apply.4} parent=0 // pred_region
    _
  $region25: #{gpat_apply.4} parent=0 // pred_fallthru
    _
  // Predicated region
  $region26: #{gpat_apply.4} parent=0 // pred_check
    _
  $region27: #{gpat_apply.4} parent=0 // pred_check_branch
    %174 = sbr.rel (0) target = $region29
  $region28: #{gpat_apply.4} parent=0 // pred_region
    _
  $region29: #{gpat_apply.4} parent=0 // pred_fallthru
    _

// kernel: gpat_apply.5
$region0: #{gpat_apply.5}
  #allocation0 [shape = 'u32[]', space=smem, size = 0x4, offset = 0x4, fixed_abs, tag = 'smem constant byte address 0x4 - core index']
  #allocation1 [shape = 'u32[72,128]{1,0:T(1,128)}', space=vmem, size = 0x9000, scoped, tag = 'internal scratch']
  %s0 = inlined_call_operand.vmem [shape: f32[128,3], index: 0, kind: input, shape index: {}]
  %s1 = inlined_call_operand.vmem [shape: f32[3,64], index: 1, kind: input, shape index: {}]
  %s2 = inlined_call_operand.vmem [shape: f32[1,64], index: 2, kind: input, shape index: {}]
  %s3 = inlined_call_operand.vmem [shape: f32[64,31], index: 3, kind: input, shape index: {}]
  %s4 = inlined_call_operand.vmem [shape: f32[1,31], index: 4, kind: input, shape index: {}]
  %s5 = inlined_call_operand.vmem [shape: f32[128,31], index: 5, kind: output, shape index: {}]
  %s6 = sld [smem:[#allocation0]]
  $region30: #{gpat_apply.5} parent=0
    _
  %s8 = ssub.s32 1, %s6
  %s9 = scalar_select 0, %s8, %s6
  // Predicated region
  $region2: #{gpat_apply.5} parent=0 // pred_check
    _
  $region3: #{gpat_apply.5} parent=0 // pred_check_branch
    %11 = sbr.rel (0) target = $region5
  $region4: #{gpat_apply.5} parent=0 // pred_region
    _
  $region5: #{gpat_apply.5} parent=0 // pred_fallthru
    _
  // Predicated region
  $region6: #{gpat_apply.5} parent=0 // pred_check
    _
  $region7: #{gpat_apply.5} parent=0 // pred_check_branch
    %13 = sbr.rel (0) target = $region9
  $region8: #{gpat_apply.5} parent=0 // pred_region
    _
  $region9: #{gpat_apply.5} parent=0 // pred_fallthru
    _
  // Predicated region
  $region10: #{gpat_apply.5} parent=0 // pred_check
    _
  $region11: #{gpat_apply.5} parent=0 // pred_check_branch
    %15 = sbr.rel (0) target = $region13
  $region12: #{gpat_apply.5} parent=0 // pred_region
    _
  $region13: #{gpat_apply.5} parent=0 // pred_fallthru
    _
  // Predicated region
  $region14: #{gpat_apply.5} parent=0 // pred_check
    _
  $region15: #{gpat_apply.5} parent=0 // pred_check_branch
    %17 = sbr.rel (0) target = $region17
  $region16: #{gpat_apply.5} parent=0 // pred_region
    _
  $region17: #{gpat_apply.5} parent=0 // pred_fallthru
    _
  // Predicated region
  $region18: #{gpat_apply.5} parent=0 // pred_check
    _
  $region19: #{gpat_apply.5} parent=0 // pred_check_branch
    %19 = sbr.rel (0) target = $region21
  $region20: #{gpat_apply.5} parent=0 // pred_region
    _
  $region21: #{gpat_apply.5} parent=0 // pred_fallthru
    _
  %v20 = vld [vmem:[%s0] sm:$0xff]
  %v21 = vld [vmem:[%s0 + $0x8] sm:$0xff]
  %v22 = vld [vmem:[%s0 + $0x10] sm:$0xff]
  %v23 = vld [vmem:[%s0 + $0x18] sm:$0xff]
  %v24 = vld [vmem:[%s0 + $0x20] sm:$0xff]
  %v25 = vld [vmem:[%s0 + $0x28] sm:$0xff]
  %v26 = vld [vmem:[%s0 + $0x30] sm:$0xff]
  %v27 = vld [vmem:[%s0 + $0x38] sm:$0xff]
  %v28 = vld [vmem:[%s0 + $0x40] sm:$0xff]
  %v29 = vld [vmem:[%s0 + $0x48] sm:$0xff]
  %v30 = vld [vmem:[%s0 + $0x50] sm:$0xff]
  %v31 = vld [vmem:[%s0 + $0x58] sm:$0xff]
  %v32 = vld [vmem:[%s0 + $0x60] sm:$0xff]
  %v33 = vld [vmem:[%s0 + $0x68] sm:$0xff]
  %v34 = vld [vmem:[%s0 + $0x70] sm:$0xff]
  %v35 = vld [vmem:[%s0 + $0x78] sm:$0xff]
  %v36 = vld [vmem:[%s1] sm:$0x7]
  %38 = vset.pattern.permute.xlu0 0
  %39 = vperm.xlu0 %38, %v20
  %v40 = vpop.permute.xlu0 %39
  %43 = vset.pattern.permute.xlu0 0
  %44 = vperm.xlu0 %43, %v21
  %v45 = vpop.permute.xlu0 %44
  %48 = vset.pattern.permute.xlu0 0
  %49 = vperm.xlu0 %48, %v22
  %v50 = vpop.permute.xlu0 %49
  %53 = vset.pattern.permute.xlu0 0
  %54 = vperm.xlu0 %53, %v23
  %v55 = vpop.permute.xlu0 %54
  %58 = vset.pattern.permute.xlu0 0
  %59 = vperm.xlu0 %58, %v24
  %v60 = vpop.permute.xlu0 %59
  %63 = vset.pattern.permute.xlu0 0
  %64 = vperm.xlu0 %63, %v25
  %v65 = vpop.permute.xlu0 %64
  %68 = vset.pattern.permute.xlu0 0
  %69 = vperm.xlu0 %68, %v26
  %v70 = vpop.permute.xlu0 %69
  %73 = vset.pattern.permute.xlu0 0
  %74 = vperm.xlu0 %73, %v27
  %v75 = vpop.permute.xlu0 %74
  %78 = vset.pattern.permute.xlu0 0
  %79 = vperm.xlu0 %78, %v28
  %v80 = vpop.permute.xlu0 %79
  %83 = vset.pattern.permute.xlu0 0
  %84 = vperm.xlu0 %83, %v29
  %v85 = vpop.permute.xlu0 %84
  %88 = vset.pattern.permute.xlu0 0
  %89 = vperm.xlu0 %88, %v30
  %v90 = vpop.permute.xlu0 %89
  %93 = vset.pattern.permute.xlu0 0
  %94 = vperm.xlu0 %93, %v31
  %v95 = vpop.permute.xlu0 %94
  %98 = vset.pattern.permute.xlu0 0
  %99 = vperm.xlu0 %98, %v32
  %v100 = vpop.permute.xlu0 %99
  %103 = vset.pattern.permute.xlu0 0
  %104 = vperm.xlu0 %103, %v33
  %v105 = vpop.permute.xlu0 %104
  %108 = vset.pattern.permute.xlu0 0
  %109 = vperm.xlu0 %108, %v34
  %v110 = vpop.permute.xlu0 %109
  %113 = vset.pattern.permute.xlu0 0
  %114 = vperm.xlu0 %113, %v35
  %v115 = vpop.permute.xlu0 %114
  %v117 = vperm.slane %v36, 0
  %v118 = vmul.f32 %v40, %v117
  %v119 = vmul.f32 %v45, %v117
  %v120 = vmul.f32 %v50, %v117
  %v121 = vmul.f32 %v55, %v117
  %v122 = vmul.f32 %v60, %v117
  %v123 = vmul.f32 %v65, %v117
  %v124 = vmul.f32 %v70, %v117
  %v125 = vmul.f32 %v75, %v117
  %v126 = vmul.f32 %v80, %v117
  %v127 = vmul.f32 %v85, %v117
  %v128 = vmul.f32 %v90, %v117
  %v129 = vmul.f32 %v95, %v117
  %v130 = vmul.f32 %v100, %v117
  %v131 = vmul.f32 %v105, %v117
  %v132 = vmul.f32 %v110, %v117
  %v133 = vmul.f32 %v115, %v117
  %134 = vset.pattern.permute.xlu0 1
  %135 = vperm.xlu0 %134, %v20
  %v136 = vpop.permute.xlu0 %135
  %138 = vset.pattern.permute.xlu0 1
  %139 = vperm.xlu0 %138, %v21
  %v140 = vpop.permute.xlu0 %139
  %142 = vset.pattern.permute.xlu0 1
  %143 = vperm.xlu0 %142, %v22
  %v144 = vpop.permute.xlu0 %143
  %146 = vset.pattern.permute.xlu0 1
  %147 = vperm.xlu0 %146, %v23
  %v148 = vpop.permute.xlu0 %147
  %150 = vset.pattern.permute.xlu0 1
  %151 = vperm.xlu0 %150, %v24
  %v152 = vpop.permute.xlu0 %151
  %154 = vset.pattern.permute.xlu0 1
  %155 = vperm.xlu0 %154, %v25
  %v156 = vpop.permute.xlu0 %155
  %158 = vset.pattern.permute.xlu0 1
  %159 = vperm.xlu0 %158, %v26
  %v160 = vpop.permute.xlu0 %159
  %162 = vset.pattern.permute.xlu0 1
  %163 = vperm.xlu0 %162, %v27
  %v164 = vpop.permute.xlu0 %163
  %166 = vset.pattern.permute.xlu0 1
  %167 = vperm.xlu0 %166, %v28
  %v168 = vpop.permute.xlu0 %167
  %170 = vset.pattern.permute.xlu0 1
  %171 = vperm.xlu0 %170, %v29
  %v172 = vpop.permute.xlu0 %171
  %174 = vset.pattern.permute.xlu0 1
  %175 = vperm.xlu0 %174, %v30
  %v176 = vpop.permute.xlu0 %175
  %178 = vset.pattern.permute.xlu0 1
  %179 = vperm.xlu0 %178, %v31
  %v180 = vpop.permute.xlu0 %179
  %182 = vset.pattern.permute.xlu0 1
  %183 = vperm.xlu0 %182, %v32
  %v184 = vpop.permute.xlu0 %183
  %186 = vset.pattern.permute.xlu0 1
  %187 = vperm.xlu0 %186, %v33
  %v188 = vpop.permute.xlu0 %187
  %190 = vset.pattern.permute.xlu0 1
  %191 = vperm.xlu0 %190, %v34
  %v192 = vpop.permute.xlu0 %191
  %194 = vset.pattern.permute.xlu0 1
  %195 = vperm.xlu0 %194, %v35
  %v196 = vpop.permute.xlu0 %195
  %v198 = vperm.slane %v36, 1
  %v199 = vmul.f32 %v136, %v198
  %v200 = vmul.f32 %v140, %v198
  %v201 = vmul.f32 %v144, %v198
  %v202 = vmul.f32 %v148, %v198
  %v203 = vmul.f32 %v152, %v198
  %v204 = vmul.f32 %v156, %v198
  %v205 = vmul.f32 %v160, %v198
  %v206 = vmul.f32 %v164, %v198
  %v207 = vmul.f32 %v168, %v198
  %v208 = vmul.f32 %v172, %v198
  %v209 = vmul.f32 %v176, %v198
  %v210 = vmul.f32 %v180, %v198
  %v211 = vmul.f32 %v184, %v198
  %v212 = vmul.f32 %v188, %v198
  %v213 = vmul.f32 %v192, %v198
  %v214 = vmul.f32 %v196, %v198
  %v215 = vadd.f32 %v118, %v199
  %v216 = vadd.f32 %v119, %v200
  %v217 = vadd.f32 %v120, %v201
  %v218 = vadd.f32 %v121, %v202
  %v219 = vadd.f32 %v122, %v203
  %v220 = vadd.f32 %v123, %v204
  %v221 = vadd.f32 %v124, %v205
  %v222 = vadd.f32 %v125, %v206
  %v223 = vadd.f32 %v126, %v207
  %v224 = vadd.f32 %v127, %v208
  %v225 = vadd.f32 %v128, %v209
  %v226 = vadd.f32 %v129, %v210
  %v227 = vadd.f32 %v130, %v211
  %v228 = vadd.f32 %v131, %v212
  %v229 = vadd.f32 %v132, %v213
  %v230 = vadd.f32 %v133, %v214
  %231 = vset.pattern.permute.xlu0 2
  %232 = vperm.xlu0 %231, %v20
  %v233 = vpop.permute.xlu0 %232
  %235 = vset.pattern.permute.xlu0 2
  %236 = vperm.xlu0 %235, %v21
  %v237 = vpop.permute.xlu0 %236
  %239 = vset.pattern.permute.xlu0 2
  %240 = vperm.xlu0 %239, %v22
  %v241 = vpop.permute.xlu0 %240
  %243 = vset.pattern.permute.xlu0 2
  %244 = vperm.xlu0 %243, %v23
  %v245 = vpop.permute.xlu0 %244
  %247 = vset.pattern.permute.xlu0 2
  %248 = vperm.xlu0 %247, %v24
  %v249 = vpop.permute.xlu0 %248
  %251 = vset.pattern.permute.xlu0 2
  %252 = vperm.xlu0 %251, %v25
  %v253 = vpop.permute.xlu0 %252
  %255 = vset.pattern.permute.xlu0 2
  %256 = vperm.xlu0 %255, %v26
  %v257 = vpop.permute.xlu0 %256
  %259 = vset.pattern.permute.xlu0 2
  %260 = vperm.xlu0 %259, %v27
  %v261 = vpop.permute.xlu0 %260
  %263 = vset.pattern.permute.xlu0 2
  %264 = vperm.xlu0 %263, %v28
  %v265 = vpop.permute.xlu0 %264
  %267 = vset.pattern.permute.xlu0 2
  %268 = vperm.xlu0 %267, %v29
  %v269 = vpop.permute.xlu0 %268
  %271 = vset.pattern.permute.xlu0 2
  %272 = vperm.xlu0 %271, %v30
  %v273 = vpop.permute.xlu0 %272
  %275 = vset.pattern.permute.xlu0 2
  %276 = vperm.xlu0 %275, %v31
  %v277 = vpop.permute.xlu0 %276
  %279 = vset.pattern.permute.xlu0 2
  %280 = vperm.xlu0 %279, %v32
  %v281 = vpop.permute.xlu0 %280
  %283 = vset.pattern.permute.xlu0 2
  %284 = vperm.xlu0 %283, %v33
  %v285 = vpop.permute.xlu0 %284
  %287 = vset.pattern.permute.xlu0 2
  %288 = vperm.xlu0 %287, %v34
  %v289 = vpop.permute.xlu0 %288
  %291 = vset.pattern.permute.xlu0 2
  %292 = vperm.xlu0 %291, %v35
  %v293 = vpop.permute.xlu0 %292
  %v295 = vperm.slane %v36, 2
  %v296 = vmul.f32 %v233, %v295
  %v297 = vmul.f32 %v237, %v295
  %v298 = vmul.f32 %v241, %v295
  %v299 = vmul.f32 %v245, %v295
  %v300 = vmul.f32 %v249, %v295
  %v301 = vmul.f32 %v253, %v295
  %v302 = vmul.f32 %v257, %v295
  %v303 = vmul.f32 %v261, %v295
  %v304 = vmul.f32 %v265, %v295
  %v305 = vmul.f32 %v269, %v295
  %v306 = vmul.f32 %v273, %v295
  %v307 = vmul.f32 %v277, %v295
  %v308 = vmul.f32 %v281, %v295
  %v309 = vmul.f32 %v285, %v295
  %v310 = vmul.f32 %v289, %v295
  %v311 = vmul.f32 %v293, %v295
  %v312 = vadd.f32 %v215, %v296
  %v313 = vadd.f32 %v216, %v297
  %v314 = vadd.f32 %v217, %v298
  %v315 = vadd.f32 %v218, %v299
  %v316 = vadd.f32 %v219, %v300
  %v317 = vadd.f32 %v220, %v301
  %v318 = vadd.f32 %v221, %v302
  %v319 = vadd.f32 %v222, %v303
  %v320 = vadd.f32 %v223, %v304
  %v321 = vadd.f32 %v224, %v305
  %v322 = vadd.f32 %v225, %v306
  %v323 = vadd.f32 %v226, %v307
  %v324 = vadd.f32 %v227, %v308
  %v325 = vadd.f32 %v228, %v309
  %v326 = vadd.f32 %v229, %v310
  %v327 = vadd.f32 %v230, %v311
  %v328 = vld [vmem:[%s2] sm:$0x1]
  %v330 = vperm.slane %v328, 0
  %v332 = vadd.f32 %v312, %v330
  %v333 = vadd.f32 %v313, %v330
  %v334 = vadd.f32 %v314, %v330
  %v335 = vadd.f32 %v315, %v330
  %v336 = vadd.f32 %v316, %v330
  %v337 = vadd.f32 %v317, %v330
  %v338 = vadd.f32 %v318, %v330
  %v339 = vadd.f32 %v319, %v330
  %v340 = vadd.f32 %v320, %v330
  %v341 = vadd.f32 %v321, %v330
  %v342 = vadd.f32 %v322, %v330
  %v343 = vadd.f32 %v323, %v330
  %v344 = vadd.f32 %v324, %v330
  %v345 = vadd.f32 %v325, %v330
  %v346 = vadd.f32 %v326, %v330
  %v347 = vadd.f32 %v327, %v330
  %v348 = vmax.f32 %v332, 0.0
  %v349 = vmax.f32 %v333, 0.0
  %v350 = vmax.f32 %v334, 0.0
  %v351 = vmax.f32 %v335, 0.0
  %v352 = vmax.f32 %v336, 0.0
  %v353 = vmax.f32 %v337, 0.0
  %v354 = vmax.f32 %v338, 0.0
  %v355 = vmax.f32 %v339, 0.0
  %v356 = vmax.f32 %v340, 0.0
  %v357 = vmax.f32 %v341, 0.0
  %v358 = vmax.f32 %v342, 0.0
  %v359 = vmax.f32 %v343, 0.0
  %v360 = vmax.f32 %v344, 0.0
  %v361 = vmax.f32 %v345, 0.0
  %v362 = vmax.f32 %v346, 0.0
  %v363 = vmax.f32 %v347, 0.0
  %v364 = vld [vmem:[%s3] sm:$0xff]
  %v365 = vld [vmem:[%s3 + $0x8] sm:$0xff]
  %v366 = vld [vmem:[%s3 + $0x10] sm:$0xff]
  %v367 = vld [vmem:[%s3 + $0x18] sm:$0xff]
  %v368 = vld [vmem:[%s3 + $0x20] sm:$0xff]
  %v369 = vld [vmem:[%s3 + $0x28] sm:$0xff]
  %v370 = vld [vmem:[%s3 + $0x30] sm:$0xff]
  %v371 = vld [vmem:[%s3 + $0x38] sm:$0xff]
  %v372 = vld [vmem:[%s4] sm:$0x1]
  %v374 = vperm.slane %v372, 0
  %vm376 = vcmask 523264
  %v378 = vsel %vm376, %v348, 0
  %v381 = vsel %vm376, %v349, 0
  %v384 = vsel %vm376, %v350, 0
  %v387 = vsel %vm376, %v351, 0
  %v390 = vsel %vm376, %v352, 0
  %v393 = vsel %vm376, %v353, 0
  %v396 = vsel %vm376, %v354, 0
  %v399 = vsel %vm376, %v355, 0
  %v402 = vsel %vm376, %v356, 0
  %v405 = vsel %vm376, %v357, 0
  %v408 = vsel %vm376, %v358, 0
  %v411 = vsel %vm376, %v359, 0
  %v414 = vsel %vm376, %v360, 0
  %v417 = vsel %vm376, %v361, 0
  %v420 = vsel %vm376, %v362, 0
  %v423 = vsel %vm376, %v363, 0
  %425 = vmatpush.msra.mxu0 0.0
  %426 = vmatpush.msra.mxu0 0.0
  %427 = vmatpush.msra.mxu0 0.0
  %428 = vmatpush.msra.mxu0 0.0
  %429 = vmatpush.msra.mxu0 0.0
  %430 = vmatpush.msra.mxu0 0.0
  %431 = vmatpush.msra.mxu0 0.0
  %432 = vmatpush.msra.mxu0 0.0
  %433 = vmatpush.msra.mxu0 %v371
  %434 = vmatpush.msra.mxu0 %v370
  %435 = vmatpush.msra.mxu0 %v369
  %436 = vmatpush.msra.mxu0 %v368
  %437 = vmatpush.msra.mxu0 %v367
  %438 = vmatpush.msra.mxu0 %v366
  %439 = vmatpush.msra.mxu0 %v365
  %440 = vmatpush.msra.mxu0 %v364
  %441 = vmatmul.f32.gmra.mxu0 %v378
  %v442 = vpop.f32.mrf.mxu0
  %v443 = vadd.f32 %v374, %v442
  %444 = vmatmul.f32.gmra.mxu0 %v381
  %v445 = vpop.f32.mrf.mxu0
  %v446 = vadd.f32 %v374, %v445
  %447 = vmatmul.f32.gmra.mxu0 %v384
  %v448 = vpop.f32.mrf.mxu0
  %v449 = vadd.f32 %v374, %v448
  %450 = vmatmul.f32.gmra.mxu0 %v387
  %v451 = vpop.f32.mrf.mxu0
  %v452 = vadd.f32 %v374, %v451
  %453 = vmatmul.f32.gmra.mxu0 %v390
  %v454 = vpop.f32.mrf.mxu0
  %v455 = vadd.f32 %v374, %v454
  %456 = vmatmul.f32.gmra.mxu0 %v393
  %v457 = vpop.f32.mrf.mxu0
  %v458 = vadd.f32 %v374, %v457
  %459 = vmatmul.f32.gmra.mxu0 %v396
  %v460 = vpop.f32.mrf.mxu0
  %v461 = vadd.f32 %v374, %v460
  %462 = vmatmul.f32.gmra.mxu0 %v399
  %v463 = vpop.f32.mrf.mxu0
  %v464 = vadd.f32 %v374, %v463
  %465 = vmatmul.f32.gmra.mxu0 %v402
  %v466 = vpop.f32.mrf.mxu0
  %v467 = vadd.f32 %v374, %v466
  %468 = vmatmul.f32.gmra.mxu0 %v405
  %v469 = vpop.f32.mrf.mxu0
  %v470 = vadd.f32 %v374, %v469
  %471 = vmatmul.f32.gmra.mxu0 %v408
  %v472 = vpop.f32.mrf.mxu0
  %v473 = vadd.f32 %v374, %v472
  %474 = vmatmul.f32.gmra.mxu0 %v411
  %v475 = vpop.f32.mrf.mxu0
  %v476 = vadd.f32 %v374, %v475
  %477 = vmatmul.f32.gmra.mxu0 %v414
  %v478 = vpop.f32.mrf.mxu0
  %v479 = vadd.f32 %v374, %v478
  %480 = vmatmul.f32.gmra.mxu0 %v417
  %v481 = vpop.f32.mrf.mxu0
  %v482 = vadd.f32 %v374, %v481
  %483 = vmatmul.f32.gmra.mxu0 %v420
  %v484 = vpop.f32.mrf.mxu0
  %v485 = vadd.f32 %v374, %v484
  %486 = vmatmul.f32.gmra.mxu0 %v423
  %v487 = vpop.f32.mrf.mxu0
  %v488 = vadd.f32 %v374, %v487
  %489 = vdwg.mxu0
  %vm490 = vcmask 252928
  %491 = vst.msk [vmem:[%s5] sm:$0xff] %vm490, %v443
  %492 = vst.msk [vmem:[%s5 + $0x8] sm:$0xff] %vm490, %v446
  %493 = vst.msk [vmem:[%s5 + $0x10] sm:$0xff] %vm490, %v449
  %494 = vst.msk [vmem:[%s5 + $0x18] sm:$0xff] %vm490, %v452
  %495 = vst.msk [vmem:[%s5 + $0x20] sm:$0xff] %vm490, %v455
  %496 = vst.msk [vmem:[%s5 + $0x28] sm:$0xff] %vm490, %v458
  %497 = vst.msk [vmem:[%s5 + $0x30] sm:$0xff] %vm490, %v461
  %498 = vst.msk [vmem:[%s5 + $0x38] sm:$0xff] %vm490, %v464
  %499 = vst.msk [vmem:[%s5 + $0x40] sm:$0xff] %vm490, %v467
  %500 = vst.msk [vmem:[%s5 + $0x48] sm:$0xff] %vm490, %v470
  %501 = vst.msk [vmem:[%s5 + $0x50] sm:$0xff] %vm490, %v473
  %502 = vst.msk [vmem:[%s5 + $0x58] sm:$0xff] %vm490, %v476
  %503 = vst.msk [vmem:[%s5 + $0x60] sm:$0xff] %vm490, %v479
  %504 = vst.msk [vmem:[%s5 + $0x68] sm:$0xff] %vm490, %v482
  %505 = vst.msk [vmem:[%s5 + $0x70] sm:$0xff] %vm490, %v485
  %506 = vst.msk [vmem:[%s5 + $0x78] sm:$0xff] %vm490, %v488
  // Predicated region
  $region22: #{gpat_apply.5} parent=0 // pred_check
    _
  $region23: #{gpat_apply.5} parent=0 // pred_check_branch
    %508 = sbr.rel (0) target = $region25
  $region24: #{gpat_apply.5} parent=0 // pred_region
    _
  $region25: #{gpat_apply.5} parent=0 // pred_fallthru
    _
  // Predicated region
  $region26: #{gpat_apply.5} parent=0 // pred_check
    _
  $region27: #{gpat_apply.5} parent=0 // pred_check_branch
    %510 = sbr.rel (0) target = $region29
  $region28: #{gpat_apply.5} parent=0 // pred_region
    _
  $region29: #{gpat_apply.5} parent=0 // pred_fallthru
    _

// kernel: gpat_apply.7
$region0: #{gpat_apply.7}
  #allocation0 [shape = 'u32[]', space=smem, size = 0x4, offset = 0x4, fixed_abs, tag = 'smem constant byte address 0x4 - core index']
  #allocation1 [shape = 'u32[72,128]{1,0:T(1,128)}', space=vmem, size = 0x9000, scoped, tag = 'internal scratch']
  %s0 = inlined_call_operand.vmem [shape: f32[2,16,32], index: 0, kind: input, shape index: {}]
  %s1 = inlined_call_operand.vmem [shape: f32[2,4,32], index: 1, kind: input, shape index: {}]
  %s2 = inlined_call_operand.vmem [shape: f32[2,1,4], index: 2, kind: input, shape index: {}]
  %s3 = inlined_call_operand.vmem [shape: f32[32,32], index: 3, kind: input, shape index: {}]
  %s4 = inlined_call_operand.vmem [shape: f32[1,32], index: 4, kind: input, shape index: {}]
  %s5 = inlined_call_operand.vmem [shape: f32[32,32], index: 5, kind: input, shape index: {}]
  %s6 = inlined_call_operand.vmem [shape: f32[1,32], index: 6, kind: input, shape index: {}]
  %s7 = inlined_call_operand.vmem [shape: f32[32,32], index: 7, kind: input, shape index: {}]
  %s8 = inlined_call_operand.vmem [shape: f32[1,32], index: 8, kind: input, shape index: {}]
  %s9 = inlined_call_operand.vmem [shape: f32[32,32], index: 9, kind: input, shape index: {}]
  %s10 = inlined_call_operand.vmem [shape: f32[1,32], index: 10, kind: input, shape index: {}]
  %s11 = inlined_call_operand.vmem [shape: f32[2,16,4], index: 11, kind: output, shape index: {}]
  %s12 = sld [smem:[#allocation0]]
  $region77: #{gpat_apply.7} parent=0
    _
  %s14 = ssub.s32 1, %s12
  %s15 = scalar_select 0, %s14, %s12
  loop: start=0, step=1, limit=4
  $region2: #{gpat_apply.7} parent=0 // loop_pre_header
    _
  $region3: #{gpat_apply.7} parent=0 // loop_header
    %s17 = sphi 0, %s21
    %p18 = scmp.ge.s32.totalorder %s17, 4
    %s27 = sphi 0, %s29
    %s30 = sphi 0, %s27
    %s31 = sphi 0, %s30
    %s47 = sphi 0, %s31
    %s53 = sphi 0, %s55
    %s56 = sphi 0, %s53
    %s57 = sphi 0, %s56
    %s73 = sphi 0, %s57
    %s79 = sphi 0, %s81
    %s82 = sphi 0, %s79
    %s83 = sphi 0, %s82
    %s99 = sphi 0, %s83
    %s103 = sphi 0, %s103
    %s105 = sphi 0, %s103
    %s106 = sphi 0, %s105
    %s120 = sphi 0, %s106
    %s124 = sphi 0, %s124
    %s126 = sphi 0, %s124
    %s127 = sphi 0, %s126
    %s141 = sphi 0, %s127
    %s145 = sphi 0, %s145
    %s147 = sphi 0, %s145
    %s148 = sphi 0, %s147
    %s162 = sphi 0, %s148
    %s166 = sphi 0, %s166
    %s168 = sphi 0, %s166
    %s169 = sphi 0, %s168
    %s183 = sphi 0, %s169
    %s187 = sphi 0, %s187
    %s189 = sphi 0, %s187
    %s190 = sphi 0, %s189
    %s204 = sphi 0, %s190
    %s208 = sphi 0, %s208
    %s210 = sphi 0, %s208
    %s211 = sphi 0, %s210
    %s225 = sphi 0, %s211
    %s229 = sphi 0, %s229
    %s231 = sphi 0, %s229
    %s232 = sphi 0, %s231
    %s246 = sphi 0, %s232
    %s250 = sphi 0, %s250
    %s252 = sphi 0, %s250
    %s253 = sphi 0, %s252
    %s267 = sphi 0, %s253
    %s273 = sphi 0, %s275
    %s276 = sphi 0, %s273
    %s277 = sphi 0, %s276
    %s293 = sphi 0, %s277
  $region4: #{gpat_apply.7} parent=0 // loop_header_branch
    %20 = sbr.rel (%p18) target = $region8
  $region5: #{gpat_apply.7} parent=0 // loop_body
    %s22 = ssub.s32 %s17, 1
    %s23 = ssub.s32 %s17, 2
    %s24 = sadd.s32 %s17, 1
    %s25 = ssub.s32 %s17, %s24
    %p26 = scmp.eq.s32.totalorder %s25, 0
    %s28 = sadd.s32 %s27, 1
    %s29 = scalar_select %p26, %s27, %s28
    %p32 = pneg %p26
    %p33 = scmp.eq.s32.totalorder %s17, 1
    %p34 = por %p32, %p33
    %p35 = scmp.ne.s32.totalorder %s27, %s30
    %p36 = scmp.eq.s32.totalorder %s17, 0
    %p37 = por %p35, %p36
    %p38 = scmp.ne.s32.totalorder %s27, %s30
    %p39 = scmp.eq.s32.totalorder %s22, 1
    %p40 = por %p38, %p39
    %p41 = scmp.ne.s32.totalorder %s30, %s31
    %p42 = scmp.eq.s32.totalorder %s22, 0
    %p43 = por %p41, %p42
    %p44 = scmp.ne.s32.totalorder %s30, %s31
    %p45 = scmp.eq.s32.totalorder %s23, 1
    %p46 = por %p44, %p45
    %p48 = scmp.ne.s32.totalorder %s31, %s47
    %p49 = scmp.eq.s32.totalorder %s23, 0
    %p50 = por %p48, %p49
    %s51 = ssub.s32 %s17, %s24
    %p52 = scmp.eq.s32.totalorder %s51, 0
    %s54 = sadd.s32 %s53, 1
    %s55 = scalar_select %p52, %s53, %s54
    %p58 = pneg %p52
    %p59 = scmp.eq.s32.totalorder %s17, 1
    %p60 = por %p58, %p59
    %p61 = scmp.ne.s32.totalorder %s53, %s56
    %p62 = scmp.eq.s32.totalorder %s17, 0
    %p63 = por %p61, %p62
    %p64 = scmp.ne.s32.totalorder %s53, %s56
    %p65 = scmp.eq.s32.totalorder %s22, 1
    %p66 = por %p64, %p65
    %p67 = scmp.ne.s32.totalorder %s56, %s57
    %p68 = scmp.eq.s32.totalorder %s22, 0
    %p69 = por %p67, %p68
    %p70 = scmp.ne.s32.totalorder %s56, %s57
    %p71 = scmp.eq.s32.totalorder %s23, 1
    %p72 = por %p70, %p71
    %p74 = scmp.ne.s32.totalorder %s57, %s73
    %p75 = scmp.eq.s32.totalorder %s23, 0
    %p76 = por %p74, %p75
    %s77 = ssub.s32 %s17, %s24
    %p78 = scmp.eq.s32.totalorder %s77, 0
    %s80 = sadd.s32 %s79, 1
    %s81 = scalar_select %p78, %s79, %s80
    %p84 = pneg %p78
    %p85 = scmp.eq.s32.totalorder %s17, 1
    %p86 = por %p84, %p85
    %p87 = scmp.ne.s32.totalorder %s79, %s82
    %p88 = scmp.eq.s32.totalorder %s17, 0
    %p89 = por %p87, %p88
    %p90 = scmp.ne.s32.totalorder %s79, %s82
    %p91 = scmp.eq.s32.totalorder %s22, 1
    %p92 = por %p90, %p91
    %p93 = scmp.ne.s32.totalorder %s82, %s83
    %p94 = scmp.eq.s32.totalorder %s22, 0
    %p95 = por %p93, %p94
    %p96 = scmp.ne.s32.totalorder %s82, %s83
    %p97 = scmp.eq.s32.totalorder %s23, 1
    %p98 = por %p96, %p97
    %p100 = scmp.ne.s32.totalorder %s83, %s99
    %p101 = scmp.eq.s32.totalorder %s23, 0
    %p102 = por %p100, %p101
    %s104 = sadd.s32 %s103, 1
    %p107 = scmp.eq.s32.totalorder %s17, 1
    %p108 = scmp.ne.s32.totalorder %s103, %s105
    %p109 = scmp.eq.s32.totalorder %s17, 0
    %p110 = por %p108, %p109
    %p111 = scmp.ne.s32.totalorder %s103, %s105
    %p112 = scmp.eq.s32.totalorder %s22, 1
    %p113 = por %p111, %p112
    %p114 = scmp.ne.s32.totalorder %s105, %s106
    %p115 = scmp.eq.s32.totalorder %s22, 0
    %p116 = por %p114, %p115
    %p117 = scmp.ne.s32.totalorder %s105, %s106
    %p118 = scmp.eq.s32.totalorder %s23, 1
    %p119 = por %p117, %p118
    %p121 = scmp.ne.s32.totalorder %s106, %s120
    %p122 = scmp.eq.s32.totalorder %s23, 0
    %p123 = por %p121, %p122
    %s125 = sadd.s32 %s124, 1
    %p128 = scmp.eq.s32.totalorder %s17, 1
    %p129 = scmp.ne.s32.totalorder %s124, %s126
    %p130 = scmp.eq.s32.totalorder %s17, 0
    %p131 = por %p129, %p130
    %p132 = scmp.ne.s32.totalorder %s124, %s126
    %p133 = scmp.eq.s32.totalorder %s22, 1
    %p134 = por %p132, %p133
    %p135 = scmp.ne.s32.totalorder %s126, %s127
    %p136 = scmp.eq.s32.totalorder %s22, 0
    %p137 = por %p135, %p136
    %p138 = scmp.ne.s32.totalorder %s126, %s127
    %p139 = scmp.eq.s32.totalorder %s23, 1
    %p140 = por %p138, %p139
    %p142 = scmp.ne.s32.totalorder %s127, %s141
    %p143 = scmp.eq.s32.totalorder %s23, 0
    %p144 = por %p142, %p143
    %s146 = sadd.s32 %s145, 1
    %p149 = scmp.eq.s32.totalorder %s17, 1
    %p150 = scmp.ne.s32.totalorder %s145, %s147
    %p151 = scmp.eq.s32.totalorder %s17, 0
    %p152 = por %p150, %p151
    %p153 = scmp.ne.s32.totalorder %s145, %s147
    %p154 = scmp.eq.s32.totalorder %s22, 1
    %p155 = por %p153, %p154
    %p156 = scmp.ne.s32.totalorder %s147, %s148
    %p157 = scmp.eq.s32.totalorder %s22, 0
    %p158 = por %p156, %p157
    %p159 = scmp.ne.s32.totalorder %s147, %s148
    %p160 = scmp.eq.s32.totalorder %s23, 1
    %p161 = por %p159, %p160
    %p163 = scmp.ne.s32.totalorder %s148, %s162
    %p164 = scmp.eq.s32.totalorder %s23, 0
    %p165 = por %p163, %p164
    %s167 = sadd.s32 %s166, 1
    %p170 = scmp.eq.s32.totalorder %s17, 1
    %p171 = scmp.ne.s32.totalorder %s166, %s168
    %p172 = scmp.eq.s32.totalorder %s17, 0
    %p173 = por %p171, %p172
    %p174 = scmp.ne.s32.totalorder %s166, %s168
    %p175 = scmp.eq.s32.totalorder %s22, 1
    %p176 = por %p174, %p175
    %p177 = scmp.ne.s32.totalorder %s168, %s169
    %p178 = scmp.eq.s32.totalorder %s22, 0
    %p179 = por %p177, %p178
    %p180 = scmp.ne.s32.totalorder %s168, %s169
    %p181 = scmp.eq.s32.totalorder %s23, 1
    %p182 = por %p180, %p181
    %p184 = scmp.ne.s32.totalorder %s169, %s183
    %p185 = scmp.eq.s32.totalorder %s23, 0
    %p186 = por %p184, %p185
    %s188 = sadd.s32 %s187, 1
    %p191 = scmp.eq.s32.totalorder %s17, 1
    %p192 = scmp.ne.s32.totalorder %s187, %s189
    %p193 = scmp.eq.s32.totalorder %s17, 0
    %p194 = por %p192, %p193
    %p195 = scmp.ne.s32.totalorder %s187, %s189
    %p196 = scmp.eq.s32.totalorder %s22, 1
    %p197 = por %p195, %p196
    %p198 = scmp.ne.s32.totalorder %s189, %s190
    %p199 = scmp.eq.s32.totalorder %s22, 0
    %p200 = por %p198, %p199
    %p201 = scmp.ne.s32.totalorder %s189, %s190
    %p202 = scmp.eq.s32.totalorder %s23, 1
    %p203 = por %p201, %p202
    %p205 = scmp.ne.s32.totalorder %s190, %s204
    %p206 = scmp.eq.s32.totalorder %s23, 0
    %p207 = por %p205, %p206
    %s209 = sadd.s32 %s208, 1
    %p212 = scmp.eq.s32.totalorder %s17, 1
    %p213 = scmp.ne.s32.totalorder %s208, %s210
    %p214 = scmp.eq.s32.totalorder %s17, 0
    %p215 = por %p213, %p214
    %p216 = scmp.ne.s32.totalorder %s208, %s210
    %p217 = scmp.eq.s32.totalorder %s22, 1
    %p218 = por %p216, %p217
    %p219 = scmp.ne.s32.totalorder %s210, %s211
    %p220 = scmp.eq.s32.totalorder %s22, 0
    %p221 = por %p219, %p220
    %p222 = scmp.ne.s32.totalorder %s210, %s211
    %p223 = scmp.eq.s32.totalorder %s23, 1
    %p224 = por %p222, %p223
    %p226 = scmp.ne.s32.totalorder %s211, %s225
    %p227 = scmp.eq.s32.totalorder %s23, 0
    %p228 = por %p226, %p227
    %s230 = sadd.s32 %s229, 1
    %p233 = scmp.eq.s32.totalorder %s17, 1
    %p234 = scmp.ne.s32.totalorder %s229, %s231
    %p235 = scmp.eq.s32.totalorder %s17, 0
    %p236 = por %p234, %p235
    %p237 = scmp.ne.s32.totalorder %s229, %s231
    %p238 = scmp.eq.s32.totalorder %s22, 1
    %p239 = por %p237, %p238
    %p240 = scmp.ne.s32.totalorder %s231, %s232
    %p241 = scmp.eq.s32.totalorder %s22, 0
    %p242 = por %p240, %p241
    %p243 = scmp.ne.s32.totalorder %s231, %s232
    %p244 = scmp.eq.s32.totalorder %s23, 1
    %p245 = por %p243, %p244
    %p247 = scmp.ne.s32.totalorder %s232, %s246
    %p248 = scmp.eq.s32.totalorder %s23, 0
    %p249 = por %p247, %p248
    %s251 = sadd.s32 %s250, 1
    %p254 = scmp.eq.s32.totalorder %s17, 1
    %p255 = scmp.ne.s32.totalorder %s250, %s252
    %p256 = scmp.eq.s32.totalorder %s17, 0
    %p257 = por %p255, %p256
    %p258 = scmp.ne.s32.totalorder %s250, %s252
    %p259 = scmp.eq.s32.totalorder %s22, 1
    %p260 = por %p258, %p259
    %p261 = scmp.ne.s32.totalorder %s252, %s253
    %p262 = scmp.eq.s32.totalorder %s22, 0
    %p263 = por %p261, %p262
    %p264 = scmp.ne.s32.totalorder %s252, %s253
    %p265 = scmp.eq.s32.totalorder %s23, 1
    %p266 = por %p264, %p265
    %p268 = scmp.ne.s32.totalorder %s253, %s267
    %p269 = scmp.eq.s32.totalorder %s23, 0
    %p270 = por %p268, %p269
    %s271 = ssub.s32 %s17, %s24
    %p272 = scmp.eq.s32.totalorder %s271, 0
    %s274 = sadd.s32 %s273, 1
    %s275 = scalar_select %p272, %s273, %s274
    %p278 = pneg %p272
    %p279 = scmp.eq.s32.totalorder %s17, 1
    %p280 = por %p278, %p279
    %p281 = scmp.ne.s32.totalorder %s273, %s276
    %p282 = scmp.eq.s32.totalorder %s17, 0
    %p283 = por %p281, %p282
    %p284 = scmp.ne.s32.totalorder %s273, %s276
    %p285 = scmp.eq.s32.totalorder %s22, 1
    %p286 = por %p284, %p285
    %p287 = scmp.ne.s32.totalorder %s276, %s277
    %p288 = scmp.eq.s32.totalorder %s22, 0
    %p289 = por %p287, %p288
    %p290 = scmp.ne.s32.totalorder %s276, %s277
    %p291 = scmp.eq.s32.totalorder %s23, 1
    %p292 = por %p290, %p291
    %p294 = scmp.ne.s32.totalorder %s277, %s293
    %p295 = scmp.eq.s32.totalorder %s23, 0
    %p296 = por %p294, %p295
    %p297 = scmp.le.s32.totalorder 1, %s17
    %p298 = scmp.lt.s32.totalorder %s17, 3
    %p299 = pnand %p297, %p298
    %p300 = pneg %p299
    // Predicated region
    $region9: #{gpat_apply.7} parent=5 // pred_check
      _
    $region10: #{gpat_apply.7} parent=5 // pred_check_branch
      %302 = sbr.rel (%p299) target = $region12
    $region11: #{gpat_apply.7} parent=5 // pred_region
      %s303 = ssub.s32 %s17, 1
      // Predicated region
      $region13: #{gpat_apply.7} parent=11 // pred_check
        %p304 = pneg %p116
      $region14: #{gpat_apply.7} parent=11 // pred_check_branch
        %306 = sbr.rel (%p304) target = $region16
      $region15: #{gpat_apply.7} parent=11 // pred_region
        _
      $region16: #{gpat_apply.7} parent=11 // pred_fallthru
        _
      // Predicated region
      $region17: #{gpat_apply.7} parent=11 // pred_check
        %p307 = pneg %p137
      $region18: #{gpat_apply.7} parent=11 // pred_check_branch
        %309 = sbr.rel (%p307) target = $region20
      $region19: #{gpat_apply.7} parent=11 // pred_region
        _
      $region20: #{gpat_apply.7} parent=11 // pred_fallthru
        _
      // Predicated region
      $region21: #{gpat_apply.7} parent=11 // pred_check
        %p310 = pneg %p158
      $region22: #{gpat_apply.7} parent=11 // pred_check_branch
        %312 = sbr.rel (%p310) target = $region24
      $region23: #{gpat_apply.7} parent=11 // pred_region
        _
      $region24: #{gpat_apply.7} parent=11 // pred_fallthru
        _
      // Predicated region
      $region25: #{gpat_apply.7} parent=11 // pred_check
        %p313 = pneg %p179
      $region26: #{gpat_apply.7} parent=11 // pred_check_branch
        %315 = sbr.rel (%p313) target = $region28
      $region27: #{gpat_apply.7} parent=11 // pred_region
        _
      $region28: #{gpat_apply.7} parent=11 // pred_fallthru
        _
      // Predicated region
      $region29: #{gpat_apply.7} parent=11 // pred_check
        %p316 = pneg %p200
      $region30: #{gpat_apply.7} parent=11 // pred_check_branch
        %318 = sbr.rel (%p316) target = $region32
      $region31: #{gpat_apply.7} parent=11 // pred_region
        _
      $region32: #{gpat_apply.7} parent=11 // pred_fallthru
        _
      // Predicated region
      $region33: #{gpat_apply.7} parent=11 // pred_check
        %p319 = pneg %p221
      $region34: #{gpat_apply.7} parent=11 // pred_check_branch
        %321 = sbr.rel (%p319) target = $region36
      $region35: #{gpat_apply.7} parent=11 // pred_region
        _
      $region36: #{gpat_apply.7} parent=11 // pred_fallthru
        _
      // Predicated region
      $region37: #{gpat_apply.7} parent=11 // pred_check
        %p322 = pneg %p242
      $region38: #{gpat_apply.7} parent=11 // pred_check_branch
        %324 = sbr.rel (%p322) target = $region40
      $region39: #{gpat_apply.7} parent=11 // pred_region
        _
      $region40: #{gpat_apply.7} parent=11 // pred_fallthru
        _
      // Predicated region
      $region41: #{gpat_apply.7} parent=11 // pred_check
        %p325 = pneg %p263
      $region42: #{gpat_apply.7} parent=11 // pred_check_branch
        %327 = sbr.rel (%p325) target = $region44
      $region43: #{gpat_apply.7} parent=11 // pred_region
        _
      $region44: #{gpat_apply.7} parent=11 // pred_fallthru
        _
    $region12: #{gpat_apply.7} parent=5 // pred_fallthru
      _
    %p328 = scmp.lt.s32.totalorder %s17, 2
    // Predicated region
    $region45: #{gpat_apply.7} parent=5 // pred_check
      %p329 = pneg %p328
    $region46: #{gpat_apply.7} parent=5 // pred_check_branch
      %331 = sbr.rel (%p329) target = $region48
    $region47: #{gpat_apply.7} parent=5 // pred_region
      // Predicated region
      $region49: #{gpat_apply.7} parent=47 // pred_check
        %p332 = pneg %p37
      $region50: #{gpat_apply.7} parent=47 // pred_check_branch
        %334 = sbr.rel (%p332) target = $region52
      $region51: #{gpat_apply.7} parent=47 // pred_region
        %p335 = scmp.lt.s32.totalorder %s17, 1
        %s336 = scalar_select %p335, %s17, 1
        %s337 = smul.addr %s336, 2
        %s338 = smul.addr %s337, 8
        %s339 = scalar_lea.vmem %s0, %s338
      $region52: #{gpat_apply.7} parent=47 // pred_fallthru
        _
      // Predicated region
      $region53: #{gpat_apply.7} parent=47 // pred_check
        %p340 = pneg %p63
      $region54: #{gpat_apply.7} parent=47 // pred_check_branch
        %342 = sbr.rel (%p340) target = $region56
      $region55: #{gpat_apply.7} parent=47 // pred_region
        %p343 = scmp.lt.s32.totalorder %s17, 1
        %s344 = scalar_select %p343, %s17, 1
        %s345 = smul.addr %s344, 4
        %s346 = scalar_lea.vmem %s1, %s345
      $region56: #{gpat_apply.7} parent=47 // pred_fallthru
        _
      // Predicated region
      $region57: #{gpat_apply.7} parent=47 // pred_check
        %p347 = pneg %p89
      $region58: #{gpat_apply.7} parent=47 // pred_check_branch
        %349 = sbr.rel (%p347) target = $region60
      $region59: #{gpat_apply.7} parent=47 // pred_region
        %p350 = scmp.lt.s32.totalorder %s17, 1
        %s351 = scalar_select %p350, %s17, 1
        %s352 = scalar_lea.vmem %s2, %s351
      $region60: #{gpat_apply.7} parent=47 // pred_fallthru
        _
    $region48: #{gpat_apply.7} parent=5 // pred_fallthru
      _
    %p353 = scmp.le.s32.totalorder 1, %s17
    %p354 = scmp.lt.s32.totalorder %s17, 3
    %p355 = pnand %p353, %p354
    %p356 = pneg %p355
    // Predicated region
    $region61: #{gpat_apply.7} parent=5 // pred_check
      _
    $region62: #{gpat_apply.7} parent=5 // pred_check_branch
      %358 = sbr.rel (%p355) target = $region64
    $region63: #{gpat_apply.7} parent=5 // pred_region
      %s359 = ssub.s32 %s17, 1
      %p360 = scmp.lt.s32.totalorder %s22, 1
      %s361 = scalar_select %p360, %s22, 1
      %s362 = smul.addr %s361, 2
      %s363 = smul.addr %s362, 8
      %s364 = scalar_lea.vmem %s0, %s363
      %p365 = pneg %p43
      %p366 = pneg %p40
      %p367 = scmp.lt.s32.totalorder %s22, 1
      %s368 = scalar_select %p367, %s22, 1
      %s369 = smul.addr %s368, 4
      %s370 = scalar_lea.vmem %s1, %s369
      %p371 = pneg %p69
      %p372 = pneg %p66
      %p373 = scmp.lt.s32.totalorder %s22, 1
      %s374 = scalar_select %p373, %s22, 1
      %s375 = scalar_lea.vmem %s2, %s374
      %p376 = pneg %p95
      %p377 = pneg %p92
      %p378 = pneg %p116
      %p379 = pneg %p113
      %p380 = pneg %p137
      %p381 = pneg %p134
      %p382 = pneg %p158
      %p383 = pneg %p155
      %p384 = pneg %p179
      %p385 = pneg %p176
      %p386 = pneg %p200
      %p387 = pneg %p197
      %p388 = pneg %p221
      %p389 = pneg %p218
      %p390 = pneg %p242
      %p391 = pneg %p239
      %p392 = pneg %p263
      %p393 = pneg %p260
      %p394 = pneg %p289
      %p395 = pneg %p286
      %p396 = scmp.lt.s32.totalorder %s22, 1
      %s397 = scalar_select %p396, %s22, 1
      %s398 = smul.addr %s397, 2
      %s399 = smul.addr %s398, 8
      %s400 = scalar_lea.vmem %s11, %s399
      %p401 = scmp.lt.s32.totalorder %s22, 1
      %s402 = scalar_select %p401, %s22, 1
      %s403 = smul.addr %s402, 2
      %s404 = smul.addr %s403, 8
      %s405 = scalar_lea.vmem %s0, %s404
      %p406 = scmp.lt.s32.totalorder %s22, 1
      %s407 = scalar_select %p406, %s22, 1
      %s408 = smul.addr %s407, 4
      %s409 = scalar_lea.vmem %s1, %s408
      %p410 = scmp.lt.s32.totalorder %s22, 1
      %s411 = scalar_select %p410, %s22, 1
      %s412 = scalar_lea.vmem %s2, %s411
      %p413 = scmp.lt.s32.totalorder %s22, 1
      %s414 = scalar_select %p413, %s22, 1
      %s415 = smul.addr %s414, 2
      %s416 = smul.addr %s415, 8
      %s417 = scalar_lea.vmem %s11, %s416
      %v418 = vld [vmem:[%s405] sm:$0xff]
      %v419 = vld [vmem:[%s405 + $0x8] sm:$0xff]
      %v420 = vld [vmem:[%s409] sm:$0xf]
      %v421 = vld [vmem:[%s412] sm:$0x1]
      %v422 = vld [vmem:[%s3] sm:$0xff]
      %v423 = vld [vmem:[%s3 + $0x8] sm:$0xff]
      %v424 = vld [vmem:[%s3 + $0x10] sm:$0xff]
      %v425 = vld [vmem:[%s3 + $0x18] sm:$0xff]
      %v426 = vld [vmem:[%s4] sm:$0x1]
      %v428 = vperm.slane %v426, 0
      %vm430 = vcmask 261120
      %v432 = vsel %vm430, %v418, 0
      %v435 = vsel %vm430, %v419, 0
      %437 = vmatpush.msra.mxu0 0.0
      %438 = vmatpush.msra.mxu0 0.0
      %439 = vmatpush.msra.mxu0 0.0
      %440 = vmatpush.msra.mxu0 0.0
      %441 = vmatpush.msra.mxu0 0.0
      %442 = vmatpush.msra.mxu0 0.0
      %443 = vmatpush.msra.mxu0 0.0
      %444 = vmatpush.msra.mxu0 0.0
      %445 = vmatpush.msra.mxu0 0.0
      %446 = vmatpush.msra.mxu0 0.0
      %447 = vmatpush.msra.mxu0 0.0
      %448 = vmatpush.msra.mxu0 0.0
      %449 = vmatpush.msra.mxu0 %v425
      %450 = vmatpush.msra.mxu0 %v424
      %451 = vmatpush.msra.mxu0 %v423
      %452 = vmatpush.msra.mxu0 %v422
      %453 = vmatmul.f32.gmra.mxu0 %v432
      %v454 = vpop.f32.mrf.mxu0
      %v455 = vadd.f32 %v428, %v454
      %456 = vmatmul.f32.gmra.mxu0 %v435
      %v457 = vpop.f32.mrf.mxu0
      %v458 = vadd.f32 %v428, %v457
      %459 = vdwg.mxu0
      %v460 = vmax.f32 %v455, 0.0
      %v461 = vmax.f32 %v458, 0.0
      %v462 = vld [vmem:[%s5] sm:$0xff]
      %v463 = vld [vmem:[%s5 + $0x8] sm:$0xff]
      %v464 = vld [vmem:[%s5 + $0x10] sm:$0xff]
      %v465 = vld [vmem:[%s5 + $0x18] sm:$0xff]
      %v466 = vld [vmem:[%s6] sm:$0x1]
      %v468 = vperm.slane %v466, 0
      %v471 = vsel %vm430, %v460, 0
      %v474 = vsel %vm430, %v461, 0
      %476 = vmatpush.msra.mxu0 0.0
      %477 = vmatpush.msra.mxu0 0.0
      %478 = vmatpush.msra.mxu0 0.0
      %479 = vmatpush.msra.mxu0 0.0
      %480 = vmatpush.msra.mxu0 0.0
      %481 = vmatpush.msra.mxu0 0.0
      %482 = vmatpush.msra.mxu0 0.0
      %483 = vmatpush.msra.mxu0 0.0
      %484 = vmatpush.msra.mxu0 0.0
      %485 = vmatpush.msra.mxu0 0.0
      %486 = vmatpush.msra.mxu0 0.0
      %487 = vmatpush.msra.mxu0 0.0
      %488 = vmatpush.msra.mxu0 %v465
      %489 = vmatpush.msra.mxu0 %v464
      %490 = vmatpush.msra.mxu0 %v463
      %491 = vmatpush.msra.mxu0 %v462
      %492 = vmatmul.f32.gmra.mxu0 %v471
      %v493 = vpop.f32.mrf.mxu0
      %v494 = vadd.f32 %v468, %v493
      %495 = vmatmul.f32.gmra.mxu0 %v474
      %v496 = vpop.f32.mrf.mxu0
      %v497 = vadd.f32 %v468, %v496
      %498 = vdwg.mxu0
      %v499 = vld [vmem:[%s7] sm:$0xff]
      %v500 = vld [vmem:[%s7 + $0x8] sm:$0xff]
      %v501 = vld [vmem:[%s7 + $0x10] sm:$0xff]
      %v502 = vld [vmem:[%s7 + $0x18] sm:$0xff]
      %v503 = vld [vmem:[%s8] sm:$0x1]
      %v505 = vperm.slane %v503, 0
      %v508 = vsel %vm430, %v420, 0
      %510 = vmatpush.msra.mxu0 0.0
      %511 = vmatpush.msra.mxu0 0.0
      %512 = vmatpush.msra.mxu0 0.0
      %513 = vmatpush.msra.mxu0 0.0
      %514 = vmatpush.msra.mxu0 0.0
      %515 = vmatpush.msra.mxu0 0.0
      %516 = vmatpush.msra.mxu0 0.0
      %517 = vmatpush.msra.mxu0 0.0
      %518 = vmatpush.msra.mxu0 0.0
      %519 = vmatpush.msra.mxu0 0.0
      %520 = vmatpush.msra.mxu0 0.0
      %521 = vmatpush.msra.mxu0 0.0
      %522 = vmatpush.msra.mxu0 %v502
      %523 = vmatpush.msra.mxu0 %v501
      %524 = vmatpush.msra.mxu0 %v500
      %525 = vmatpush.msra.mxu0 %v499
      %526 = vmatmul.f32.gmra.mxu0 %v508
      %v527 = vpop.f32.mrf.mxu0
      %v528 = vadd.f32 %v505, %v527
      %529 = vdwg.mxu0
      %v530 = vmax.f32 %v528, 0.0
      %v531 = vld [vmem:[%s9] sm:$0xff]
      %v532 = vld [vmem:[%s9 + $0x8] sm:$0xff]
      %v533 = vld [vmem:[%s9 + $0x10] sm:$0xff]
      %v534 = vld [vmem:[%s9 + $0x18] sm:$0xff]
      %v535 = vld [vmem:[%s10] sm:$0x1]
      %v537 = vperm.slane %v535, 0
      %v540 = vsel %vm430, %v530, 0
      %542 = vmatpush.msra.mxu0 0.0
      %543 = vmatpush.msra.mxu0 0.0
      %544 = vmatpush.msra.mxu0 0.0
      %545 = vmatpush.msra.mxu0 0.0
      %546 = vmatpush.msra.mxu0 0.0
      %547 = vmatpush.msra.mxu0 0.0
      %548 = vmatpush.msra.mxu0 0.0
      %549 = vmatpush.msra.mxu0 0.0
      %550 = vmatpush.msra.mxu0 0.0
      %551 = vmatpush.msra.mxu0 0.0
      %552 = vmatpush.msra.mxu0 0.0
      %553 = vmatpush.msra.mxu0 0.0
      %554 = vmatpush.msra.mxu0 %v534
      %555 = vmatpush.msra.mxu0 %v533
      %556 = vmatpush.msra.mxu0 %v532
      %557 = vmatpush.msra.mxu0 %v531
      %558 = vmatmul.f32.gmra.mxu0 %v540
      %v559 = vpop.f32.mrf.mxu0
      %v560 = vadd.f32 %v537, %v559
      %561 = vdwg.mxu0
      %v563 = vsel %vm430, %v494, 0
      %v566 = vsel %vm430, %v497, 0
      %v569 = vsel %vm430, %v560, 0
      %571 = vmatpush.xpose.msra.mxu0 0.0
      %572 = vmatpush.xpose.msra.mxu0 0.0
      %573 = vmatpush.xpose.msra.mxu0 0.0
      %574 = vmatpush.xpose.msra.mxu0 0.0
      %575 = vmatpush.xpose.msra.mxu0 0.0
      %576 = vmatpush.xpose.msra.mxu0 0.0
      %577 = vmatpush.xpose.msra.mxu0 0.0
      %578 = vmatpush.xpose.msra.mxu0 0.0
      %579 = vmatpush.xpose.msra.mxu0 0.0
      %580 = vmatpush.xpose.msra.mxu0 0.0
      %581 = vmatpush.xpose.msra.mxu0 0.0
      %582 = vmatpush.xpose.msra.mxu0 0.0
      %583 = vmatpush.xpose.msra.mxu0 0.0
      %584 = vmatpush.xpose.msra.mxu0 0.0
      %585 = vmatpush.xpose.msra.mxu0 0.0
      %586 = vmatpush.xpose.msra.mxu0 %v569
      %587 = vmatmul.f32.gmra.mxu0 %v563
      %v588 = vpop.f32.mrf.mxu0
      %v589 = vadd.f32 0.0, %v588
      %590 = vmatmul.f32.gmra.mxu0 %v566
      %v591 = vpop.f32.mrf.mxu0
      %v592 = vadd.f32 0.0, %v591
      %593 = vdwg.mxu0
      %v594 = vmul.f32 %v589, 0.17677669
      %v595 = vmul.f32 %v592, 0.17677669
      %v597 = vperm.slane %v421, 0
      %v599 = vadd.f32 %v594, %v597
      %v600 = vadd.f32 %v595, %v597
      %vm601 = vcmask 31744
      %v602 = vsel %vm601, %v599, -inf
      %603 = vmax.xlane.f32.xlu0 %v602
      %v604 = vpop.xlane.xlu0 %603
      %v605 = vsel %vm601, %v600, -inf
      %606 = vmax.xlane.f32.xlu0 %v605
      %v607 = vpop.xlane.xlu0 %606
      %v608 = vsub.f32 %v599, %v604
      %v609 = vsub.f32 %v600, %v607
      %v610 = vmul.f32 %v608, 1.442695
      %v611 = vpow.pop %v610
      %v612 = vmul.f32 %v609, 1.442695
      %v613 = vpow.pop %v612
      %v614 = vsel %vm601, %v611, 0.0
      %615 = vadd.xlane.f32.xlu0 %v614
      %v616 = vpop.xlane.xlu0 %615
      %v617 = vsel %vm601, %v613, 0.0
      %618 = vadd.xlane.f32.xlu0 %v617
      %v619 = vpop.xlane.xlu0 %618
      %v620 = vrcp.pop %v616
      %v621 = vmul.f32 %v616, %v620
      %v622 = vsub.f32 1.0, %v621
      %v623 = vmul.f32 %v620, %v622
      %v624 = vadd.f32 %v620, %v623
      %vm625 = vweird.f32 %v616
      %vm626 = vweird.f32 %v620
      %vm627 = vmor %vm625, %vm626
      %v628 = vsel %vm627, %v620, %v624
      %v629 = vand.u32 2147483647, %v616
      %vm630 = vcmp.eq.f32.partialorder %v629, 8.507059e+37
      %v631 = vand.u32 %v616, 2147483648
      %v632 = vor.u32 1.1754944e-38, %v631
      %v633 = vsel %vm630, %v632, %v628
      %v634 = vmul.f32 %v611, %v633
      %v635 = vrcp.pop %v619
      %v636 = vmul.f32 %v619, %v635
      %v637 = vsub.f32 1.0, %v636
      %v638 = vmul.f32 %v635, %v637
      %v639 = vadd.f32 %v635, %v638
      %vm640 = vweird.f32 %v619
      %vm641 = vweird.f32 %v635
      %vm642 = vmor %vm640, %vm641
      %v643 = vsel %vm642, %v635, %v639
      %v644 = vand.u32 2147483647, %v619
      %vm645 = vcmp.eq.f32.partialorder %v644, 8.507059e+37
      %v646 = vand.u32 %v619, 2147483648
      %v647 = vor.u32 1.1754944e-38, %v646
      %v648 = vsel %vm645, %v647, %v643
      %v649 = vmul.f32 %v613, %v648
      %650 = vst.msk [vmem:[%s417] sm:$0xff] %vm601, %v634
      %651 = vst.msk [vmem:[%s417 + $0x8] sm:$0xff] %vm601, %v649
      %p652 = scmp.lt.s32.totalorder %s22, 1
      %s653 = scalar_select %p652, %s22, 1
      %s654 = smul.addr %s653, 2
      %s655 = smul.addr %s654, 8
      %s656 = scalar_lea.vmem %s11, %s655
      // Predicated region
      $region65: #{gpat_apply.7} parent=63 // pred_check
        %p657 = pneg %p286
      $region66: #{gpat_apply.7} parent=63 // pred_check_branch
        %659 = sbr.rel (%p657) target = $region68
      $region67: #{gpat_apply.7} parent=63 // pred_region
        _
      $region68: #{gpat_apply.7} parent=63 // pred_fallthru
        _
    $region64: #{gpat_apply.7} parent=5 // pred_fallthru
      _
    %p660 = scmp.le.s32.totalorder 2, %s17
    // Predicated region
    $region69: #{gpat_apply.7} parent=5 // pred_check
      %p661 = pneg %p660
    $region70: #{gpat_apply.7} parent=5 // pred_check_branch
      %663 = sbr.rel (%p661) target = $region72
    $region71: #{gpat_apply.7} parent=5 // pred_region
      %s664 = ssub.s32 %s17, 2
      // Predicated region
      $region73: #{gpat_apply.7} parent=71 // pred_check
        %p665 = pneg %p292
      $region74: #{gpat_apply.7} parent=71 // pred_check_branch
        %667 = sbr.rel (%p665) target = $region76
      $region75: #{gpat_apply.7} parent=71 // pred_region
        %p668 = scmp.lt.s32.totalorder %s23, 1
        %s669 = scalar_select %p668, %s23, 1
        %s670 = smul.addr %s669, 2
        %s671 = smul.addr %s670, 8
        %s672 = scalar_lea.vmem %s11, %s671
      $region76: #{gpat_apply.7} parent=71 // pred_fallthru
        _
    $region72: #{gpat_apply.7} parent=5 // pred_fallthru
      _
  $region6: #{gpat_apply.7} parent=0 // loop_footer
    %s21 = sadd.s32 1, %s17
  $region7: #{gpat_apply.7} parent=0 // loop_footer_branch
    %16 = sbr.rel target = $region3
  $region8: #{gpat_apply.7} parent=0 // loop_exit
    _

// kernel: gpat_apply.6
$region0: #{gpat_apply.6}
  #allocation0 [shape = 'u32[]', space=smem, size = 0x4, offset = 0x4, fixed_abs, tag = 'smem constant byte address 0x4 - core index']
  #allocation1 [shape = 'u32[72,128]{1,0:T(1,128)}', space=vmem, size = 0x9000, scoped, tag = 'internal scratch']
  #allocation2 [shape = 'f32[16,32]{1,0:T(8,128)}', space=vmem, size = 0x2000, scoped, tag = 'scratch operand']
  #allocation3 [shape = 'f32[4,32]{1,0:T(4,128)}', space=vmem, size = 0x800, scoped, tag = 'scratch operand']
  %s0 = inlined_call_operand.vmem [shape: f32[2,16,32], index: 0, kind: input, shape index: {}]
  %s1 = inlined_call_operand.vmem [shape: f32[2,4,32], index: 1, kind: input, shape index: {}]
  %s2 = inlined_call_operand.vmem [shape: f32[2,1,4], index: 2, kind: input, shape index: {}]
  %s3 = inlined_call_operand.vmem [shape: f32[8,32,32], index: 3, kind: input, shape index: {}]
  %s4 = inlined_call_operand.vmem [shape: f32[8,1,32], index: 4, kind: input, shape index: {}]
  %s5 = inlined_call_operand.vmem [shape: f32[8,32,96], index: 5, kind: input, shape index: {}]
  %s6 = inlined_call_operand.vmem [shape: f32[8,1,96], index: 6, kind: input, shape index: {}]
  %s7 = inlined_call_operand.hbm [shape: f32[8,32,64], index: 7, kind: input, shape index: {}]
  %s8 = inlined_call_operand.vmem [shape: f32[8,1,64], index: 8, kind: input, shape index: {}]
  %s9 = inlined_call_operand.vmem [shape: f32[2,16,32], index: 9, kind: output, shape index: {0}]
  %s10 = inlined_call_operand.vmem [shape: f32[2,4,32], index: 10, kind: output, shape index: {1}]
  %11 = xla_tuple %s9, %s10
  %s12 = sld [smem:[#allocation0]]
  $region89: #{gpat_apply.6} parent=0
    _
  %s14 = ssub.s32 1, %s12
  %s15 = scalar_select 0, %s14, %s12
  $region1: #{gpat_apply.6} parent=0
    #allocation4 [shape = 'u8[32768]{0}', space=vmem, size = 0x8000, scoped, tag = 'input window, operand 7']
    #allocation5 [shape = 's32[2]{0}', space=sflag, size = 0x8, scoped, tag = 'scoped memory for gpat_apply.6']
    %16 = vsyncpa [#allocation5], 0
    %s17 = scalar_lea.sflag [#allocation5], 1
    %18 = vsyncpa %s17, 0
    loop: start=0, step=1, limit=18
    $region2: #{gpat_apply.6} parent=1 // loop_pre_header
      _
    $region3: #{gpat_apply.6} parent=1 // loop_header
      %s20 = sphi 0, %s24
      %p21 = scmp.ge.s32.totalorder %s20, 18
      %s27 = sphi 0, %s39
      %s28 = sphi 0, %s35
      %s29 = sphi 0, %s27
      %s30 = sphi 0, %s28
      %s31 = sphi 0, %s29
      %s32 = sphi 0, %s30
      %s42 = sphi 0, %s44
      %s45 = sphi 0, %s42
      %s46 = sphi 0, %s45
      %s62 = sphi 0, %s46
      %s68 = sphi 0, %s70
      %s71 = sphi 0, %s68
      %s72 = sphi 0, %s71
      %s88 = sphi 0, %s72
      %s94 = sphi 0, %s96
      %s97 = sphi 0, %s94
      %s98 = sphi 0, %s97
      %s114 = sphi 0, %s98
      %s120 = sphi 0, %s122
      %s123 = sphi 0, %s120
      %s124 = sphi 0, %s123
      %s140 = sphi 0, %s124
      %s146 = sphi 0, %s148
      %s149 = sphi 0, %s146
      %s150 = sphi 0, %s149
      %s166 = sphi 0, %s150
      %s172 = sphi 0, %s174
      %s175 = sphi 0, %s172
      %s176 = sphi 0, %s175
      %s192 = sphi 0, %s176
      %s198 = sphi 0, %s200
      %s201 = sphi 0, %s198
      %s202 = sphi 0, %s201
      %s218 = sphi 0, %s202
      %s224 = sphi 0, %s226
      %s227 = sphi 0, %s224
      %s228 = sphi 0, %s227
      %s244 = sphi 0, %s228
      %s250 = sphi 0, %s252
      %s253 = sphi 0, %s250
      %s254 = sphi 0, %s253
      %s270 = sphi 0, %s254
      %s276 = sphi 0, %s278
      %s279 = sphi 0, %s276
      %s280 = sphi 0, %s279
      %s296 = sphi 0, %s280
      %s302 = sphi 0, %s304
      %s305 = sphi 0, %s302
      %s306 = sphi 0, %s305
      %s322 = sphi 0, %s306
    $region4: #{gpat_apply.6} parent=1 // loop_header_branch
      %23 = sbr.rel (%p21) target = $region8
    $region5: #{gpat_apply.6} parent=1 // loop_body
      %s25 = ssub.s32 %s20, 1
      %s26 = ssub.s32 %s20, 2
      %s33 = sadd.s32 1, %s28
      %p34 = scmp.ge.s32.totalorder %s33, 8
      %s35 = scalar_select %p34, 0, %s33
      %s36 = sadd.s32 1, %s27
      %s37 = scalar_select %p34, %s36, %s27
      %p38 = scmp.ge.s32.totalorder %s37, 2
      %s39 = scalar_select %p38, 0, %s37
      %s40 = ssub.s32 %s27, %s39
      %p41 = scmp.eq.s32.totalorder %s40, 0
      %s43 = sadd.s32 %s42, 1
      %s44 = scalar_select %p41, %s42, %s43
      %p47 = pneg %p41
      %p48 = scmp.eq.s32.totalorder %s20, 15
      %p49 = por %p47, %p48
      %p50 = scmp.ne.s32.totalorder %s42, %s45
      %p51 = scmp.eq.s32.totalorder %s20, 0
      %p52 = por %p50, %p51
      %p53 = scmp.ne.s32.totalorder %s42, %s45
      %p54 = scmp.eq.s32.totalorder %s25, 15
      %p55 = por %p53, %p54
      %p56 = scmp.ne.s32.totalorder %s45, %s46
      %p57 = scmp.eq.s32.totalorder %s25, 0
      %p58 = por %p56, %p57
      %p59 = scmp.ne.s32.totalorder %s45, %s46
      %p60 = scmp.eq.s32.totalorder %s26, 15
      %p61 = por %p59, %p60
      %p63 = scmp.ne.s32.totalorder %s46, %s62
      %p64 = scmp.eq.s32.totalorder %s26, 0
      %p65 = por %p63, %p64
      %s66 = ssub.s32 %s27, %s39
      %p67 = scmp.eq.s32.totalorder %s66, 0
      %s69 = sadd.s32 %s68, 1
      %s70 = scalar_select %p67, %s68, %s69
      %p73 = pneg %p67
      %p74 = scmp.eq.s32.totalorder %s20, 15
      %p75 = por %p73, %p74
      %p76 = scmp.ne.s32.totalorder %s68, %s71
      %p77 = scmp.eq.s32.totalorder %s20, 0
      %p78 = por %p76, %p77
      %p79 = scmp.ne.s32.totalorder %s68, %s71
      %p80 = scmp.eq.s32.totalorder %s25, 15
      %p81 = por %p79, %p80
      %p82 = scmp.ne.s32.totalorder %s71, %s72
      %p83 = scmp.eq.s32.totalorder %s25, 0
      %p84 = por %p82, %p83
      %p85 = scmp.ne.s32.totalorder %s71, %s72
      %p86 = scmp.eq.s32.totalorder %s26, 15
      %p87 = por %p85, %p86
      %p89 = scmp.ne.s32.totalorder %s72, %s88
      %p90 = scmp.eq.s32.totalorder %s26, 0
      %p91 = por %p89, %p90
      %s92 = ssub.s32 %s27, %s39
      %p93 = scmp.eq.s32.totalorder %s92, 0
      %s95 = sadd.s32 %s94, 1
      %s96 = scalar_select %p93, %s94, %s95
      %p99 = pneg %p93
      %p100 = scmp.eq.s32.totalorder %s20, 15
      %p101 = por %p99, %p100
      %p102 = scmp.ne.s32.totalorder %s94, %s97
      %p103 = scmp.eq.s32.totalorder %s20, 0
      %p104 = por %p102, %p103
      %p105 = scmp.ne.s32.totalorder %s94, %s97
      %p106 = scmp.eq.s32.totalorder %s25, 15
      %p107 = por %p105, %p106
      %p108 = scmp.ne.s32.totalorder %s97, %s98
      %p109 = scmp.eq.s32.totalorder %s25, 0
      %p110 = por %p108, %p109
      %p111 = scmp.ne.s32.totalorder %s97, %s98
      %p112 = scmp.eq.s32.totalorder %s26, 15
      %p113 = por %p111, %p112
      %p115 = scmp.ne.s32.totalorder %s98, %s114
      %p116 = scmp.eq.s32.totalorder %s26, 0
      %p117 = por %p115, %p116
      %s118 = ssub.s32 %s28, %s35
      %p119 = scmp.eq.s32.totalorder %s118, 0
      %s121 = sadd.s32 %s120, 1
      %s122 = scalar_select %p119, %s120, %s121
      %p125 = pneg %p119
      %p126 = scmp.eq.s32.totalorder %s20, 15
      %p127 = por %p125, %p126
      %p128 = scmp.ne.s32.totalorder %s120, %s123
      %p129 = scmp.eq.s32.totalorder %s20, 0
      %p130 = por %p128, %p129
      %p131 = scmp.ne.s32.totalorder %s120, %s123
      %p132 = scmp.eq.s32.totalorder %s25, 15
      %p133 = por %p131, %p132
      %p134 = scmp.ne.s32.totalorder %s123, %s124
      %p135 = scmp.eq.s32.totalorder %s25, 0
      %p136 = por %p134, %p135
      %p137 = scmp.ne.s32.totalorder %s123, %s124
      %p138 = scmp.eq.s32.totalorder %s26, 15
      %p139 = por %p137, %p138
      %p141 = scmp.ne.s32.totalorder %s124, %s140
      %p142 = scmp.eq.s32.totalorder %s26, 0
      %p143 = por %p141, %p142
      %s144 = ssub.s32 %s28, %s35
      %p145 = scmp.eq.s32.totalorder %s144, 0
      %s147 = sadd.s32 %s146, 1
      %s148 = scalar_select %p145, %s146, %s147
      %p151 = pneg %p145
      %p152 = scmp.eq.s32.totalorder %s20, 15
      %p153 = por %p151, %p152
      %p154 = scmp.ne.s32.totalorder %s146, %s149
      %p155 = scmp.eq.s32.totalorder %s20, 0
      %p156 = por %p154, %p155
      %p157 = scmp.ne.s32.totalorder %s146, %s149
      %p158 = scmp.eq.s32.totalorder %s25, 15
      %p159 = por %p157, %p158
      %p160 = scmp.ne.s32.totalorder %s149, %s150
      %p161 = scmp.eq.s32.totalorder %s25, 0
      %p162 = por %p160, %p161
      %p163 = scmp.ne.s32.totalorder %s149, %s150
      %p164 = scmp.eq.s32.totalorder %s26, 15
      %p165 = por %p163, %p164
      %p167 = scmp.ne.s32.totalorder %s150, %s166
      %p168 = scmp.eq.s32.totalorder %s26, 0
      %p169 = por %p167, %p168
      %s170 = ssub.s32 %s28, %s35
      %p171 = scmp.eq.s32.totalorder %s170, 0
      %s173 = sadd.s32 %s172, 1
      %s174 = scalar_select %p171, %s172, %s173
      %p177 = pneg %p171
      %p178 = scmp.eq.s32.totalorder %s20, 15
      %p179 = por %p177, %p178
      %p180 = scmp.ne.s32.totalorder %s172, %s175
      %p181 = scmp.eq.s32.totalorder %s20, 0
      %p182 = por %p180, %p181
      %p183 = scmp.ne.s32.totalorder %s172, %s175
      %p184 = scmp.eq.s32.totalorder %s25, 15
      %p185 = por %p183, %p184
      %p186 = scmp.ne.s32.totalorder %s175, %s176
      %p187 = scmp.eq.s32.totalorder %s25, 0
      %p188 = por %p186, %p187
      %p189 = scmp.ne.s32.totalorder %s175, %s176
      %p190 = scmp.eq.s32.totalorder %s26, 15
      %p191 = por %p189, %p190
      %p193 = scmp.ne.s32.totalorder %s176, %s192
      %p194 = scmp.eq.s32.totalorder %s26, 0
      %p195 = por %p193, %p194
      %s196 = ssub.s32 %s28, %s35
      %p197 = scmp.eq.s32.totalorder %s196, 0
      %s199 = sadd.s32 %s198, 1
      %s200 = scalar_select %p197, %s198, %s199
      %p203 = pneg %p197
      %p204 = scmp.eq.s32.totalorder %s20, 15
      %p205 = por %p203, %p204
      %p206 = scmp.ne.s32.totalorder %s198, %s201
      %p207 = scmp.eq.s32.totalorder %s20, 0
      %p208 = por %p206, %p207
      %p209 = scmp.ne.s32.totalorder %s198, %s201
      %p210 = scmp.eq.s32.totalorder %s25, 15
      %p211 = por %p209, %p210
      %p212 = scmp.ne.s32.totalorder %s201, %s202
      %p213 = scmp.eq.s32.totalorder %s25, 0
      %p214 = por %p212, %p213
      %p215 = scmp.ne.s32.totalorder %s201, %s202
      %p216 = scmp.eq.s32.totalorder %s26, 15
      %p217 = por %p215, %p216
      %p219 = scmp.ne.s32.totalorder %s202, %s218
      %p220 = scmp.eq.s32.totalorder %s26, 0
      %p221 = por %p219, %p220
      %s222 = ssub.s32 %s28, %s35
      %p223 = scmp.eq.s32.totalorder %s222, 0
      %s225 = sadd.s32 %s224, 1
      %s226 = scalar_select %p223, %s224, %s225
      %p229 = pneg %p223
      %p230 = scmp.eq.s32.totalorder %s20, 15
      %p231 = por %p229, %p230
      %p232 = scmp.ne.s32.totalorder %s224, %s227
      %p233 = scmp.eq.s32.totalorder %s20, 0
      %p234 = por %p232, %p233
      %p235 = scmp.ne.s32.totalorder %s224, %s227
      %p236 = scmp.eq.s32.totalorder %s25, 15
      %p237 = por %p235, %p236
      %p238 = scmp.ne.s32.totalorder %s227, %s228
      %p239 = scmp.eq.s32.totalorder %s25, 0
      %p240 = por %p238, %p239
      %p241 = scmp.ne.s32.totalorder %s227, %s228
      %p242 = scmp.eq.s32.totalorder %s26, 15
      %p243 = por %p241, %p242
      %p245 = scmp.ne.s32.totalorder %s228, %s244
      %p246 = scmp.eq.s32.totalorder %s26, 0
      %p247 = por %p245, %p246
      %s248 = ssub.s32 %s28, %s35
      %p249 = scmp.eq.s32.totalorder %s248, 0
      %s251 = sadd.s32 %s250, 1
      %s252 = scalar_select %p249, %s250, %s251
      %p255 = pneg %p249
      %p256 = scmp.eq.s32.totalorder %s20, 15
      %p257 = por %p255, %p256
      %p258 = scmp.ne.s32.totalorder %s250, %s253
      %p259 = scmp.eq.s32.totalorder %s20, 0
      %p260 = por %p258, %p259
      %p261 = scmp.ne.s32.totalorder %s250, %s253
      %p262 = scmp.eq.s32.totalorder %s25, 15
      %p263 = por %p261, %p262
      %p264 = scmp.ne.s32.totalorder %s253, %s254
      %p265 = scmp.eq.s32.totalorder %s25, 0
      %p266 = por %p264, %p265
      %p267 = scmp.ne.s32.totalorder %s253, %s254
      %p268 = scmp.eq.s32.totalorder %s26, 15
      %p269 = por %p267, %p268
      %p271 = scmp.ne.s32.totalorder %s254, %s270
      %p272 = scmp.eq.s32.totalorder %s26, 0
      %p273 = por %p271, %p272
      %s274 = ssub.s32 %s27, %s39
      %p275 = scmp.eq.s32.totalorder %s274, 0
      %s277 = sadd.s32 %s276, 1
      %s278 = scalar_select %p275, %s276, %s277
      %p281 = pneg %p275
      %p282 = scmp.eq.s32.totalorder %s20, 15
      %p283 = por %p281, %p282
      %p284 = scmp.ne.s32.totalorder %s276, %s279
      %p285 = scmp.eq.s32.totalorder %s20, 0
      %p286 = por %p284, %p285
      %p287 = scmp.ne.s32.totalorder %s276, %s279
      %p288 = scmp.eq.s32.totalorder %s25, 15
      %p289 = por %p287, %p288
      %p290 = scmp.ne.s32.totalorder %s279, %s280
      %p291 = scmp.eq.s32.totalorder %s25, 0
      %p292 = por %p290, %p291
      %p293 = scmp.ne.s32.totalorder %s279, %s280
      %p294 = scmp.eq.s32.totalorder %s26, 15
      %p295 = por %p293, %p294
      %p297 = scmp.ne.s32.totalorder %s280, %s296
      %p298 = scmp.eq.s32.totalorder %s26, 0
      %p299 = por %p297, %p298
      %s300 = ssub.s32 %s27, %s39
      %p301 = scmp.eq.s32.totalorder %s300, 0
      %s303 = sadd.s32 %s302, 1
      %s304 = scalar_select %p301, %s302, %s303
      %p307 = pneg %p301
      %p308 = scmp.eq.s32.totalorder %s20, 15
      %p309 = por %p307, %p308
      %p310 = scmp.ne.s32.totalorder %s302, %s305
      %p311 = scmp.eq.s32.totalorder %s20, 0
      %p312 = por %p310, %p311
      %p313 = scmp.ne.s32.totalorder %s302, %s305
      %p314 = scmp.eq.s32.totalorder %s25, 15
      %p315 = por %p313, %p314
      %p316 = scmp.ne.s32.totalorder %s305, %s306
      %p317 = scmp.eq.s32.totalorder %s25, 0
      %p318 = por %p316, %p317
      %p319 = scmp.ne.s32.totalorder %s305, %s306
      %p320 = scmp.eq.s32.totalorder %s26, 15
      %p321 = por %p319, %p320
      %p323 = scmp.ne.s32.totalorder %s306, %s322
      %p324 = scmp.eq.s32.totalorder %s26, 0
      %p325 = por %p323, %p324
      %p326 = scmp.le.s32.totalorder 1, %s20
      %p327 = scmp.lt.s32.totalorder %s20, 17
      %p328 = pnand %p326, %p327
      %p329 = pneg %p328
      // Predicated region
      $region9: #{gpat_apply.6} parent=5 // pred_check
        _
      $region10: #{gpat_apply.6} parent=5 // pred_check_branch
        %331 = sbr.rel (%p328) target = $region12
      $region11: #{gpat_apply.6} parent=5 // pred_region
        %s332 = ssub.s32 %s20, 1
      $region12: #{gpat_apply.6} parent=5 // pred_fallthru
        _
      %p333 = scmp.lt.s32.totalorder %s20, 16
      // Predicated region
      $region13: #{gpat_apply.6} parent=5 // pred_check
        %p334 = pneg %p333
      $region14: #{gpat_apply.6} parent=5 // pred_check_branch
        %336 = sbr.rel (%p334) target = $region16
      $region15: #{gpat_apply.6} parent=5 // pred_region
        // Predicated region
        $region17: #{gpat_apply.6} parent=15 // pred_check
          %p337 = pneg %p52
        $region18: #{gpat_apply.6} parent=15 // pred_check_branch
          %339 = sbr.rel (%p337) target = $region20
        $region19: #{gpat_apply.6} parent=15 // pred_region
          %p340 = scmp.lt.s32.totalorder %s27, 1
          %s341 = scalar_select %p340, %s27, 1
          %s342 = smul.addr %s341, 2
          %s343 = smul.addr %s342, 8
          %s344 = scalar_lea.vmem %s0, %s343
        $region20: #{gpat_apply.6} parent=15 // pred_fallthru
          _
        // Predicated region
        $region21: #{gpat_apply.6} parent=15 // pred_check
          %p345 = pneg %p78
        $region22: #{gpat_apply.6} parent=15 // pred_check_branch
          %347 = sbr.rel (%p345) target = $region24
        $region23: #{gpat_apply.6} parent=15 // pred_region
          %p348 = scmp.lt.s32.totalorder %s27, 1
          %s349 = scalar_select %p348, %s27, 1
          %s350 = smul.addr %s349, 4
          %s351 = scalar_lea.vmem %s1, %s350
        $region24: #{gpat_apply.6} parent=15 // pred_fallthru
          _
        // Predicated region
        $region25: #{gpat_apply.6} parent=15 // pred_check
          %p352 = pneg %p104
        $region26: #{gpat_apply.6} parent=15 // pred_check_branch
          %354 = sbr.rel (%p352) target = $region28
        $region27: #{gpat_apply.6} parent=15 // pred_region
          %p355 = scmp.lt.s32.totalorder %s27, 1
          %s356 = scalar_select %p355, %s27, 1
          %s357 = scalar_lea.vmem %s2, %s356
        $region28: #{gpat_apply.6} parent=15 // pred_fallthru
          _
        // Predicated region
        $region29: #{gpat_apply.6} parent=15 // pred_check
          %p358 = pneg %p130
        $region30: #{gpat_apply.6} parent=15 // pred_check_branch
          %360 = sbr.rel (%p358) target = $region32
        $region31: #{gpat_apply.6} parent=15 // pred_region
          %p361 = scmp.lt.s32.totalorder %s28, 7
          %s362 = scalar_select %p361, %s28, 7
          %s363 = smul.addr %s362, 4
          %s364 = smul.addr %s363, 8
          %s365 = scalar_lea.vmem %s3, %s364
        $region32: #{gpat_apply.6} parent=15 // pred_fallthru
          _
        // Predicated region
        $region33: #{gpat_apply.6} parent=15 // pred_check
          %p366 = pneg %p156
        $region34: #{gpat_apply.6} parent=15 // pred_check_branch
          %368 = sbr.rel (%p366) target = $region36
        $region35: #{gpat_apply.6} parent=15 // pred_region
          %p369 = scmp.lt.s32.totalorder %s28, 7
          %s370 = scalar_select %p369, %s28, 7
          %s371 = scalar_lea.vmem %s4, %s370
        $region36: #{gpat_apply.6} parent=15 // pred_fallthru
          _
        // Predicated region
        $region37: #{gpat_apply.6} parent=15 // pred_check
          %p372 = pneg %p182
        $region38: #{gpat_apply.6} parent=15 // pred_check_branch
          %374 = sbr.rel (%p372) target = $region40
        $region39: #{gpat_apply.6} parent=15 // pred_region
          %p375 = scmp.lt.s32.totalorder %s28, 7
          %s376 = scalar_select %p375, %s28, 7
          %s377 = smul.addr %s376, 4
          %s378 = smul.addr %s377, 8
          %s379 = scalar_lea.vmem %s5, %s378
        $region40: #{gpat_apply.6} parent=15 // pred_fallthru
          _
        // Predicated region
        $region41: #{gpat_apply.6} parent=15 // pred_check
          %p380 = pneg %p208
        $region42: #{gpat_apply.6} parent=15 // pred_check_branch
          %382 = sbr.rel (%p380) target = $region44
        $region43: #{gpat_apply.6} parent=15 // pred_region
          %p383 = scmp.lt.s32.totalorder %s28, 7
          %s384 = scalar_select %p383, %s28, 7
          %s385 = scalar_lea.vmem %s6, %s384
        $region44: #{gpat_apply.6} parent=15 // pred_fallthru
          _
        // Predicated region
        $region45: #{gpat_apply.6} parent=15 // pred_check
          %p386 = pneg %p234
        $region46: #{gpat_apply.6} parent=15 // pred_check_branch
          %388 = sbr.rel (%p386) target = $region48
        $region47: #{gpat_apply.6} parent=15 // pred_region
          %s389 = sand.u32 %s224, 1
          %s390 = scalar_lea.sflag [#allocation5], %s389
          %s391 = sand.u32 %s224, 1
          %s392 = smul.addr %s391, 32
          %s393 = scalar_lea.vmem [#allocation4], %s392
          %395 = vsyncadd %s390, 0
          %s396 = smul.addr %s28, 4
          %s397 = smul.addr %s396, 8
          %s398 = scalar_lea.hbm %s7, %s397
          %s399 = sshll.u32 %s398, 4
          %s400 = int_to_ptr.hbm [resolvable:$true] %s399
          %s401 = sshll.u32 %s393, 4
          %s402 = int_to_ptr.vmem [resolvable:$true] %s401
          %407 = dma.hbm_to_vmem [thread:$0]  %s400, 512, %s402, %s390, 128, 128, 8
        $region48: #{gpat_apply.6} parent=15 // pred_fallthru
          _
        // Predicated region
        $region49: #{gpat_apply.6} parent=15 // pred_check
          %p408 = pneg %p260
        $region50: #{gpat_apply.6} parent=15 // pred_check_branch
          %410 = sbr.rel (%p408) target = $region52
        $region51: #{gpat_apply.6} parent=15 // pred_region
          %p411 = scmp.lt.s32.totalorder %s28, 7
          %s412 = scalar_select %p411, %s28, 7
          %s413 = scalar_lea.vmem %s8, %s412
        $region52: #{gpat_apply.6} parent=15 // pred_fallthru
          _
      $region16: #{gpat_apply.6} parent=5 // pred_fallthru
        _
      %p414 = scmp.le.s32.totalorder 1, %s20
      %p415 = scmp.lt.s32.totalorder %s20, 17
      %p416 = pnand %p414, %p415
      %p417 = pneg %p416
      // Predicated region
      $region53: #{gpat_apply.6} parent=5 // pred_check
        _
      $region54: #{gpat_apply.6} parent=5 // pred_check_branch
        %419 = sbr.rel (%p416) target = $region56
      $region55: #{gpat_apply.6} parent=5 // pred_region
        %s420 = ssub.s32 %s20, 1
        %s421 = sand.u32 %s227, 1
        %s422 = scalar_lea.sflag [#allocation5], %s421
        %s423 = sand.u32 %s227, 1
        %s424 = smul.addr %s423, 32
        %s425 = scalar_lea.vmem [#allocation4], %s424
        // Predicated region
        $region57: #{gpat_apply.6} parent=55 // pred_check
          %p426 = pneg %p240
        $region58: #{gpat_apply.6} parent=55 // pred_check_branch
          %428 = sbr.rel (%p426) target = $region60
        $region59: #{gpat_apply.6} parent=55 // pred_region
          %430 = dma.done %s422, 512
        $region60: #{gpat_apply.6} parent=55 // pred_fallthru
          _
        %p431 = scmp.lt.s32.totalorder %s29, 1
        %s432 = scalar_select %p431, %s29, 1
        %s433 = smul.addr %s432, 2
        %s434 = smul.addr %s433, 8
        %s435 = scalar_lea.vmem %s0, %s434
        %p436 = pneg %p58
        %p437 = pneg %p55
        %p438 = scmp.lt.s32.totalorder %s29, 1
        %s439 = scalar_select %p438, %s29, 1
        %s440 = smul.addr %s439, 4
        %s441 = scalar_lea.vmem %s1, %s440
        %p442 = pneg %p84
        %p443 = pneg %p81
        %p444 = scmp.lt.s32.totalorder %s29, 1
        %s445 = scalar_select %p444, %s29, 1
        %s446 = scalar_lea.vmem %s2, %s445
        %p447 = pneg %p110
        %p448 = pneg %p107
        %p449 = scmp.lt.s32.totalorder %s30, 7
        %s450 = scalar_select %p449, %s30, 7
        %s451 = smul.addr %s450, 4
        %s452 = smul.addr %s451, 8
        %s453 = scalar_lea.vmem %s3, %s452
        %p454 = pneg %p136
        %p455 = pneg %p133
        %p456 = scmp.lt.s32.totalorder %s30, 7
        %s457 = scalar_select %p456, %s30, 7
        %s458 = scalar_lea.vmem %s4, %s457
        %p459 = pneg %p162
        %p460 = pneg %p159
        %p461 = scmp.lt.s32.totalorder %s30, 7
        %s462 = scalar_select %p461, %s30, 7
        %s463 = smul.addr %s462, 4
        %s464 = smul.addr %s463, 8
        %s465 = scalar_lea.vmem %s5, %s464
        %p466 = pneg %p188
        %p467 = pneg %p185
        %p468 = scmp.lt.s32.totalorder %s30, 7
        %s469 = scalar_select %p468, %s30, 7
        %s470 = scalar_lea.vmem %s6, %s469
        %p471 = pneg %p214
        %p472 = pneg %p211
        %s473 = sand.u32 %s227, 1
        %s474 = scalar_lea.sflag [#allocation5], %s473
        %s475 = sand.u32 %s227, 1
        %s476 = smul.addr %s475, 32
        %s477 = scalar_lea.vmem [#allocation4], %s476
        %p478 = pneg %p240
        %p479 = pneg %p237
        %p480 = scmp.lt.s32.totalorder %s30, 7
        %s481 = scalar_select %p480, %s30, 7
        %s482 = scalar_lea.vmem %s8, %s481
        %p483 = pneg %p266
        %p484 = pneg %p263
        %p485 = pneg %p292
        %p486 = pneg %p289
        %p487 = scmp.lt.s32.totalorder %s29, 1
        %s488 = scalar_select %p487, %s29, 1
        %s489 = smul.addr %s488, 2
        %s490 = smul.addr %s489, 8
        %s491 = scalar_lea.vmem %s9, %s490
        %p492 = pneg %p318
        %p493 = pneg %p315
        %p494 = scmp.lt.s32.totalorder %s29, 1
        %s495 = scalar_select %p494, %s29, 1
        %s496 = smul.addr %s495, 4
        %s497 = scalar_lea.vmem %s10, %s496
        %p498 = scmp.lt.s32.totalorder %s29, 1
        %s499 = scalar_select %p498, %s29, 1
        %s500 = smul.addr %s499, 2
        %s501 = smul.addr %s500, 8
        %s502 = scalar_lea.vmem %s0, %s501
        %p503 = scmp.lt.s32.totalorder %s29, 1
        %s504 = scalar_select %p503, %s29, 1
        %s505 = smul.addr %s504, 4
        %s506 = scalar_lea.vmem %s1, %s505
        %p507 = scmp.lt.s32.totalorder %s29, 1
        %s508 = scalar_select %p507, %s29, 1
        %s509 = scalar_lea.vmem %s2, %s508
        %p510 = scmp.lt.s32.totalorder %s30, 7
        %s511 = scalar_select %p510, %s30, 7
        %s512 = smul.addr %s511, 4
        %s513 = smul.addr %s512, 8
        %s514 = scalar_lea.vmem %s3, %s513
        %p515 = scmp.lt.s32.totalorder %s30, 7
        %s516 = scalar_select %p515, %s30, 7
        %s517 = scalar_lea.vmem %s4, %s516
        %p518 = scmp.lt.s32.totalorder %s30, 7
        %s519 = scalar_select %p518, %s30, 7
        %s520 = smul.addr %s519, 4
        %s521 = smul.addr %s520, 8
        %s522 = scalar_lea.vmem %s5, %s521
        %p523 = scmp.lt.s32.totalorder %s30, 7
        %s524 = scalar_select %p523, %s30, 7
        %s525 = scalar_lea.vmem %s6, %s524
        %p526 = scmp.lt.s32.totalorder %s30, 7
        %s527 = scalar_select %p526, %s30, 7
        %s528 = scalar_lea.vmem %s8, %s527
        %p529 = scmp.lt.s32.totalorder %s29, 1
        %s530 = scalar_select %p529, %s29, 1
        %s531 = smul.addr %s530, 2
        %s532 = smul.addr %s531, 8
        %s533 = scalar_lea.vmem %s9, %s532
        %p534 = scmp.lt.s32.totalorder %s29, 1
        %s535 = scalar_select %p534, %s29, 1
        %s536 = smul.addr %s535, 4
        %s537 = scalar_lea.vmem %s10, %s536
        %p538 = scmp.eq.s32.totalorder %s30, 0
        // Predicated region
        $region61: #{gpat_apply.6} parent=55 // pred_check
          %p539 = pneg %p538
        $region62: #{gpat_apply.6} parent=55 // pred_check_branch
          %541 = sbr.rel (%p539) target = $region64
        $region63: #{gpat_apply.6} parent=55 // pred_region
          %v542 = vld [vmem:[%s502] sm:$0xff]
          %v543 = vld [vmem:[%s502 + $0x8] sm:$0xff]
          %vm544 = vcmask 261120
          %545 = vst.msk [vmem:[#allocation2] sm:$0xff] %vm544, %v542
          %546 = vst.msk [vmem:[#allocation2 + $0x8] sm:$0xff] %vm544, %v543
          %v547 = vld [vmem:[%s506] sm:$0xf]
          %vm548 = vcmask 257024
          %549 = vst.msk [vmem:[#allocation3] sm:$0xf] %vm548, %v547
        $region64: #{gpat_apply.6} parent=55 // pred_fallthru
          _
        %v550 = vld [vmem:[#allocation2] sm:$0xff]
        %v551 = vld [vmem:[#allocation2 + $0x8] sm:$0xff]
        %v552 = vld [vmem:[#allocation3] sm:$0xf]
        %v553 = vld [vmem:[%s509] sm:$0x1]
        %v554 = vld [vmem:[%s522] sm:$0xff]
        %v555 = vld [vmem:[%s522 + $0x8] sm:$0xff]
        %v556 = vld [vmem:[%s522 + $0x10] sm:$0xff]
        %v557 = vld [vmem:[%s522 + $0x18] sm:$0xff]
        %v558 = vld [vmem:[%s525] sm:$0x1]
        %v560 = vperm.slane %v558, 0
        %vm562 = vcmask 261120
        %v564 = vsel %vm562, %v552, 0
        %566 = vmatpush.msra.mxu0 0.0
        %567 = vmatpush.msra.mxu0 0.0
        %568 = vmatpush.msra.mxu0 0.0
        %569 = vmatpush.msra.mxu0 0.0
        %570 = vmatpush.msra.mxu0 0.0
        %571 = vmatpush.msra.mxu0 0.0
        %572 = vmatpush.msra.mxu0 0.0
        %573 = vmatpush.msra.mxu0 0.0
        %574 = vmatpush.msra.mxu0 0.0
        %575 = vmatpush.msra.mxu0 0.0
        %576 = vmatpush.msra.mxu0 0.0
        %577 = vmatpush.msra.mxu0 0.0
        %578 = vmatpush.msra.mxu0 %v557
        %579 = vmatpush.msra.mxu0 %v556
        %580 = vmatpush.msra.mxu0 %v555
        %581 = vmatpush.msra.mxu0 %v554
        %582 = vmatmul.f32.gmra.mxu0 %v564
        %v583 = vpop.f32.mrf.mxu0
        %v584 = vadd.f32 %v560, %v583
        %585 = vdwg.mxu0
        %v586 = vld [vmem:[%s514] sm:$0xff]
        %v587 = vld [vmem:[%s514 + $0x8] sm:$0xff]
        %v588 = vld [vmem:[%s514 + $0x10] sm:$0xff]
        %v589 = vld [vmem:[%s514 + $0x18] sm:$0xff]
        %v590 = vld [vmem:[%s517] sm:$0x1]
        %v592 = vperm.slane %v590, 0
        %v595 = vsel %vm562, %v550, 0
        %v598 = vsel %vm562, %v551, 0
        %600 = vmatpush.msra.mxu0 0.0
        %601 = vmatpush.msra.mxu0 0.0
        %602 = vmatpush.msra.mxu0 0.0
        %603 = vmatpush.msra.mxu0 0.0
        %604 = vmatpush.msra.mxu0 0.0
        %605 = vmatpush.msra.mxu0 0.0
        %606 = vmatpush.msra.mxu0 0.0
        %607 = vmatpush.msra.mxu0 0.0
        %608 = vmatpush.msra.mxu0 0.0
        %609 = vmatpush.msra.mxu0 0.0
        %610 = vmatpush.msra.mxu0 0.0
        %611 = vmatpush.msra.mxu0 0.0
        %612 = vmatpush.msra.mxu0 %v589
        %613 = vmatpush.msra.mxu0 %v588
        %614 = vmatpush.msra.mxu0 %v587
        %615 = vmatpush.msra.mxu0 %v586
        %616 = vmatmul.f32.gmra.mxu0 %v595
        %v617 = vpop.f32.mrf.mxu0
        %v618 = vadd.f32 %v592, %v617
        %619 = vmatmul.f32.gmra.mxu0 %v598
        %v620 = vpop.f32.mrf.mxu0
        %v621 = vadd.f32 %v592, %v620
        %622 = vdwg.mxu0
        %v624 = vsel %vm562, %v618, 0
        %v627 = vsel %vm562, %v621, 0
        %v630 = vsel %vm562, %v584, 0
        %632 = vmatpush.xpose.msra.mxu0 0.0
        %633 = vmatpush.xpose.msra.mxu0 0.0
        %634 = vmatpush.xpose.msra.mxu0 0.0
        %635 = vmatpush.xpose.msra.mxu0 0.0
        %636 = vmatpush.xpose.msra.mxu0 0.0
        %637 = vmatpush.xpose.msra.mxu0 0.0
        %638 = vmatpush.xpose.msra.mxu0 0.0
        %639 = vmatpush.xpose.msra.mxu0 0.0
        %640 = vmatpush.xpose.msra.mxu0 0.0
        %641 = vmatpush.xpose.msra.mxu0 0.0
        %642 = vmatpush.xpose.msra.mxu0 0.0
        %643 = vmatpush.xpose.msra.mxu0 0.0
        %644 = vmatpush.xpose.msra.mxu0 0.0
        %645 = vmatpush.xpose.msra.mxu0 0.0
        %646 = vmatpush.xpose.msra.mxu0 0.0
        %647 = vmatpush.xpose.msra.mxu0 %v630
        %648 = vmatmul.f32.gmra.mxu0 %v624
        %v649 = vpop.f32.mrf.mxu0
        %v650 = vadd.f32 0.0, %v649
        %651 = vmatmul.f32.gmra.mxu0 %v627
        %v652 = vpop.f32.mrf.mxu0
        %v653 = vadd.f32 0.0, %v652
        %654 = vdwg.mxu0
        %v655 = vmul.f32 %v650, 0.17677669
        %v656 = vmul.f32 %v653, 0.17677669
        %v658 = vperm.slane %v553, 0
        %v660 = vadd.f32 %v655, %v658
        %v661 = vadd.f32 %v656, %v658
        %vm662 = vcmask 31744
        %v663 = vsel %vm662, %v660, -inf
        %664 = vmax.xlane.f32.xlu0 %v663
        %v665 = vpop.xlane.xlu0 %664
        %v666 = vsel %vm662, %v661, -inf
        %667 = vmax.xlane.f32.xlu0 %v666
        %v668 = vpop.xlane.xlu0 %667
        %v669 = vsub.f32 %v660, %v665
        %v670 = vsub.f32 %v661, %v668
        %v671 = vmul.f32 %v669, 1.442695
        %v672 = vpow.pop %v671
        %v673 = vmul.f32 %v670, 1.442695
        %v674 = vpow.pop %v673
        %v675 = vsel %vm662, %v672, 0.0
        %676 = vadd.xlane.f32.xlu0 %v675
        %v677 = vpop.xlane.xlu0 %676
        %v678 = vsel %vm662, %v674, 0.0
        %679 = vadd.xlane.f32.xlu0 %v678
        %v680 = vpop.xlane.xlu0 %679
        %v681 = vrcp.pop %v677
        %v682 = vrcp.pop %v680
        %v683 = vmul.f32 %v672, %v681
        %v684 = vmul.f32 %v674, %v682
        %685 = vrot.lane.b32.xlu0 %v584, 96
        %v686 = vpop.permute.xlu0 %685
        %v688 = vsel %vm662, %v683, 0
        %v691 = vsel %vm662, %v684, 0
        %vm693 = vcmask 1043456
        %v694 = vsel %vm693, %v686, 0
        %696 = vmatpush.msra.mxu0 0.0
        %697 = vmatpush.msra.mxu0 0.0
        %698 = vmatpush.msra.mxu0 0.0
        %699 = vmatpush.msra.mxu0 0.0
        %700 = vmatpush.msra.mxu0 0.0
        %701 = vmatpush.msra.mxu0 0.0
        %702 = vmatpush.msra.mxu0 0.0
        %703 = vmatpush.msra.mxu0 0.0
        %704 = vmatpush.msra.mxu0 0.0
        %705 = vmatpush.msra.mxu0 0.0
        %706 = vmatpush.msra.mxu0 0.0
        %707 = vmatpush.msra.mxu0 0.0
        %708 = vmatpush.msra.mxu0 0.0
        %709 = vmatpush.msra.mxu0 0.0
        %710 = vmatpush.msra.mxu0 0.0
        %711 = vmatpush.msra.mxu0 %v694
        %712 = vmatmul.f32.gmra.mxu0 %v688
        %v713 = vpop.f32.mrf.mxu0
        %v714 = vadd.f32 0.0, %v713
        %715 = vmatmul.f32.gmra.mxu0 %v691
        %v716 = vpop.f32.mrf.mxu0
        %v717 = vadd.f32 0.0, %v716
        %718 = vdwg.mxu0
        %v719 = vadd.f32 %v550, %v714
        %v720 = vadd.f32 %v551, %v717
        %v721 = vld [vmem:[%s425] sm:$0xff]
        %v722 = vld [vmem:[%s425 + $0x8] sm:$0xff]
        %v723 = vld [vmem:[%s425 + $0x10] sm:$0xff]
        %v724 = vld [vmem:[%s425 + $0x18] sm:$0xff]
        %v725 = vld [vmem:[%s528] sm:$0x1]
        %v727 = vperm.slane %v725, 0
        %v730 = vsel %vm562, %v719, 0
        %v733 = vsel %vm562, %v720, 0
        %735 = vmatpush.msra.mxu0 0.0
        %736 = vmatpush.msra.mxu0 0.0
        %737 = vmatpush.msra.mxu0 0.0
        %738 = vmatpush.msra.mxu0 0.0
        %739 = vmatpush.msra.mxu0 0.0
        %740 = vmatpush.msra.mxu0 0.0
        %741 = vmatpush.msra.mxu0 0.0
        %742 = vmatpush.msra.mxu0 0.0
        %743 = vmatpush.msra.mxu0 0.0
        %744 = vmatpush.msra.mxu0 0.0
        %745 = vmatpush.msra.mxu0 0.0
        %746 = vmatpush.msra.mxu0 0.0
        %747 = vmatpush.msra.mxu0 %v724
        %748 = vmatpush.msra.mxu0 %v723
        %749 = vmatpush.msra.mxu0 %v722
        %750 = vmatpush.msra.mxu0 %v721
        %751 = vmatmul.f32.gmra.mxu0 %v730
        %v752 = vpop.f32.mrf.mxu0
        %v753 = vadd.f32 %v727, %v752
        %754 = vmatmul.f32.gmra.mxu0 %v733
        %v755 = vpop.f32.mrf.mxu0
        %v756 = vadd.f32 %v727, %v755
        %757 = vdwg.mxu0
        %758 = vrot.lane.b32.xlu0 %v584, 64
        %v759 = vpop.permute.xlu0 %758
        %v760 = vsel %vm562, %v759, 0
        %v763 = vsel %vm562, %v753, 0
        %v766 = vsel %vm562, %v756, 0
        %768 = vmatpush.xpose.msra.mxu0 0.0
        %769 = vmatpush.xpose.msra.mxu0 0.0
        %770 = vmatpush.xpose.msra.mxu0 0.0
        %771 = vmatpush.xpose.msra.mxu0 0.0
        %772 = vmatpush.xpose.msra.mxu0 0.0
        %773 = vmatpush.xpose.msra.mxu0 0.0
        %774 = vmatpush.xpose.msra.mxu0 0.0
        %775 = vmatpush.xpose.msra.mxu0 0.0
        %776 = vmatpush.xpose.msra.mxu0 0.0
        %777 = vmatpush.xpose.msra.mxu0 0.0
        %778 = vmatpush.xpose.msra.mxu0 0.0
        %779 = vmatpush.xpose.msra.mxu0 0.0
        %780 = vmatpush.xpose.msra.mxu0 0.0
        %781 = vmatpush.xpose.msra.mxu0 0.0
        %782 = vmatpush.xpose.msra.mxu0 %v766
        %783 = vmatpush.xpose.msra.mxu0 %v763
        %784 = vmatmul.f32.gmra.mxu0 %v760
        %v785 = vpop.f32.mrf.mxu0
        %v786 = vadd.f32 0.0, %v785
        %787 = vdwg.mxu0
        %v788 = vmul.f32 %v786, 0.17677669
        %vm789 = vcmask 125952
        %v790 = vsel %vm789, %v788, -inf
        %791 = vmax.xlane.f32.xlu0 %v790
        %v792 = vpop.xlane.xlu0 %791
        %v793 = vsub.f32 %v788, %v792
        %v794 = vmul.f32 %v793, 1.442695
        %v795 = vpow.pop %v794
        %v796 = vsel %vm789, %v795, 0.0
        %797 = vadd.xlane.f32.xlu0 %v796
        %v798 = vpop.xlane.xlu0 %797
        %v799 = vrcp.pop %v798
        %v800 = vmul.f32 %v795, %v799
        %801 = vrot.lane.b32.xlu0 %v753, 96
        %v802 = vpop.permute.xlu0 %801
        %803 = vrot.lane.b32.xlu0 %v756, 96
        %v804 = vpop.permute.xlu0 %803
        %vm807 = vcmask 130048
        %v809 = vsel %vm807, %v800, 0
        %811 = vmatpush.msra.mxu0 0.0
        %812 = vmatpush.msra.mxu0 0.0
        %813 = vmatpush.msra.mxu0 0.0
        %814 = vmatpush.msra.mxu0 0.0
        %815 = vmatpush.msra.mxu0 0.0
        %816 = vmatpush.msra.mxu0 0.0
        %817 = vmatpush.msra.mxu0 0.0
        %818 = vmatpush.msra.mxu0 0.0
        %819 = vmatpush.msra.mxu0 0.0
        %820 = vmatpush.msra.mxu0 0.0
        %821 = vmatpush.msra.mxu0 0.0
        %822 = vmatpush.msra.mxu0 0.0
        %823 = vmatpush.msra.mxu0 0.0
        %824 = vmatpush.msra.mxu0 0.0
        %825 = vmatpush.msra.mxu0 %v804
        %826 = vmatpush.msra.mxu0 %v802
        %827 = vmatmul.f32.gmra.mxu0 %v809
        %v828 = vpop.f32.mrf.mxu0
        %v829 = vadd.f32 0.0, %v828
        %830 = vdwg.mxu0
        %v831 = vadd.f32 %v552, %v829
        %832 = vst.msk [vmem:[#allocation2] sm:$0xff] %vm562, %v719
        %833 = vst.msk [vmem:[#allocation2 + $0x8] sm:$0xff] %vm562, %v720
        %vm834 = vcmask 257024
        %835 = vst.msk [vmem:[#allocation3] sm:$0xf] %vm834, %v831
        %p836 = scmp.eq.s32.totalorder %s30, 7
        // Predicated region
        $region65: #{gpat_apply.6} parent=55 // pred_check
          %p837 = pneg %p836
        $region66: #{gpat_apply.6} parent=55 // pred_check_branch
          %839 = sbr.rel (%p837) target = $region68
        $region67: #{gpat_apply.6} parent=55 // pred_region
          %840 = vst.msk [vmem:[%s533] sm:$0xff] %vm562, %v719
          %841 = vst.msk [vmem:[%s533 + $0x8] sm:$0xff] %vm562, %v720
          %842 = vst.msk [vmem:[%s537] sm:$0xf] %vm834, %v831
        $region68: #{gpat_apply.6} parent=55 // pred_fallthru
          _
        %p843 = scmp.lt.s32.totalorder %s29, 1
        %s844 = scalar_select %p843, %s29, 1
        %s845 = smul.addr %s844, 2
        %s846 = smul.addr %s845, 8
        %s847 = scalar_lea.vmem %s9, %s846
        %p848 = scmp.lt.s32.totalorder %s29, 1
        %s849 = scalar_select %p848, %s29, 1
        %s850 = smul.addr %s849, 4
        %s851 = scalar_lea.vmem %s10, %s850
        // Predicated region
        $region69: #{gpat_apply.6} parent=55 // pred_check
          %p852 = pneg %p289
        $region70: #{gpat_apply.6} parent=55 // pred_check_branch
          %854 = sbr.rel (%p852) target = $region72
        $region71: #{gpat_apply.6} parent=55 // pred_region
          _
        $region72: #{gpat_apply.6} parent=55 // pred_fallthru
          _
        // Predicated region
        $region73: #{gpat_apply.6} parent=55 // pred_check
          %p855 = pneg %p315
        $region74: #{gpat_apply.6} parent=55 // pred_check_branch
          %857 = sbr.rel (%p855) target = $region76
        $region75: #{gpat_apply.6} parent=55 // pred_region
          _
        $region76: #{gpat_apply.6} parent=55 // pred_fallthru
          _
      $region56: #{gpat_apply.6} parent=5 // pred_fallthru
        _
      %p858 = scmp.le.s32.totalorder 2, %s20
      // Predicated region
      $region77: #{gpat_apply.6} parent=5 // pred_check
        %p859 = pneg %p858
      $region78: #{gpat_apply.6} parent=5 // pred_check_branch
        %861 = sbr.rel (%p859) target = $region80
      $region79: #{gpat_apply.6} parent=5 // pred_region
        %s862 = ssub.s32 %s20, 2
        // Predicated region
        $region81: #{gpat_apply.6} parent=79 // pred_check
          %p863 = pneg %p295
        $region82: #{gpat_apply.6} parent=79 // pred_check_branch
          %865 = sbr.rel (%p863) target = $region84
        $region83: #{gpat_apply.6} parent=79 // pred_region
          %p866 = scmp.lt.s32.totalorder %s31, 1
          %s867 = scalar_select %p866, %s31, 1
          %s868 = smul.addr %s867, 2
          %s869 = smul.addr %s868, 8
          %s870 = scalar_lea.vmem %s9, %s869
        $region84: #{gpat_apply.6} parent=79 // pred_fallthru
          _
        // Predicated region
        $region85: #{gpat_apply.6} parent=79 // pred_check
          %p871 = pneg %p321
        $region86: #{gpat_apply.6} parent=79 // pred_check_branch
          %873 = sbr.rel (%p871) target = $region88
        $region87: #{gpat_apply.6} parent=79 // pred_region
          %p874 = scmp.lt.s32.totalorder %s31, 1
          %s875 = scalar_select %p874, %s31, 1
          %s876 = smul.addr %s875, 4
          %s877 = scalar_lea.vmem %s10, %s876
        $region88: #{gpat_apply.6} parent=79 // pred_fallthru
          _
      $region80: #{gpat_apply.6} parent=5 // pred_fallthru
        _
    $region6: #{gpat_apply.6} parent=1 // loop_footer
      %s24 = sadd.s32 1, %s20
    $region7: #{gpat_apply.6} parent=1 // loop_footer_branch
      %19 = sbr.rel target = $region3
    $region8: #{gpat_apply.6} parent=1 // loop_exit
      _
    %878 = vsyncpa [#allocation5], 1
    %s879 = scalar_lea.sflag [#allocation5], 1
    %880 = vsyncpa %s879, 1

</llo_original>
